<compile_context>
chip_gen: v6e
topology: v6e:2x2x1
jax: 0.10.0
libtpu: 0.0.40
codegen_flags: <defaults>
</compile_context>

<pallas_src>
import jax
import jax.numpy as jnp
from jax import lax
from jax.experimental import pallas as pl
from jax.experimental.pallas import tpu as pltpu


# Grid-invariant operands (weights / biases) never change across the grid, so they do not
# need the default 2-deep pipelining; single-buffering halves their VMEM footprint.
_SINGLE_BUFFER = {"pipeline_mode": pl.Buffered(1)} if hasattr(pl, "Buffered") else {}


def _vmem_limit_bytes():
    """Generation-aware scoped-VMEM limit (~96 MiB on 128-MiB chips, 48 MiB on v7x)."""
    try:
        cap = int(pltpu.get_tpu_info().vmem_capacity_bytes)
    except Exception:
        cap = 64 * 1024 * 1024  # conservative fallback, valid on every generation
    return min(100 * 1024 * 1024, (cap * 3) // 4)


def _default_num_b_blocks(batch):
    """Split the batch across TensorCores on multi-TC chips (v7x); 1 elsewhere."""
    try:
        n_cores = int(getattr(jax.devices()[0], "num_cores", 1) or 1)
    except Exception:
        n_cores = 1
    if n_cores >= 2 and batch % 2 == 0 and (batch // 2) % 8 == 0:
        return 2
    return 1


def multistep_loss_kernel(disc_ref, state_ref, a_proj_ref, tgt_ref,
                          w1s_ref, w2_ref, b2_ref, w3_ref, b3_ref, acc_out_ref):
    # disc_ref   : (T,)       SMEM  prefetched discount**t table
    # state_ref  : (bB, S)    VMEM  initial state for this batch block (f32)
    # a_proj_ref : (T, bB, H) VMEM  precomputed actions@W1a + b1, time-major (compute dtype)
    # tgt_ref    : (T, bB, S) VMEM  target states, time-major (compute dtype)
    # w*_ref     : weights (compute dtype);  b*_ref : (1,H)/(1,S) biases (f32)
    # acc_out_ref: (bB, S)    VMEM  sum_t disc^t * (pred_t - tgt_t)^2, elementwise (f32)
    num_steps = a_proj_ref.shape[0]
    bB, S = state_ref.shape
    cdt = w1s_ref.dtype          # MXU operand dtype (bf16 by default, f32 for exact mode)

    def step(t, carry):
        pred, acc = carry                                        # both carried in f32
        # layer 1: state branch on the MXU + hoisted action branch
        h = jnp.dot(pred.astype(cdt), w1s_ref[...],
                    preferred_element_type=jnp.float32)
        h = jnp.maximum(h + a_proj_ref[t].astype(jnp.float32), 0.0)
        # layer 2 (the (1,H) bias splat per step is near-free VPU/load work)
        h = jnp.dot(h.astype(cdt), w2_ref[...],
                    preferred_element_type=jnp.float32) + b2_ref[...]
        h = jnp.maximum(h, 0.0)
        # output layer -> next predicted state (kept f32 across the rollout)
        pred = jnp.dot(h.astype(cdt), w3_ref[...],
                       preferred_element_type=jnp.float32) + b3_ref[...]
        # discounted squared error, accumulated elementwise (no per-step reduction)
        diff = pred - tgt_ref[t].astype(jnp.float32)
        acc = acc + disc_ref[t] * (diff * diff)
        return pred, acc

    pred0 = state_ref[...].astype(jnp.float32)
    acc0 = jnp.zeros((bB, S), jnp.float32)
    _, acc = lax.fori_loop(0, num_steps, step, (pred0, acc0),
                           unroll=(num_steps <= 16))
    acc_out_ref[...] = acc


def multi_step_loss(state, actions, targets, params, discount=0.99, *,
                    num_b_blocks=None, compute_dtype=jnp.bfloat16,
                    targets_time_major=False):
    """state: (B,S), actions: (B,T,A), targets: (B,T,S) (PyTorch convention), or (T,B,S)
    when targets_time_major=True.  Returns the scalar multi-step loss."""
    B, T, A = actions.shape
    S = state.shape[1]
    H = params["w2"].shape[0]

    if num_b_blocks is None:
        num_b_blocks = _default_num_b_blocks(B)
    assert B % num_b_blocks == 0
    bB = B // num_b_blocks
    # (8,128) rule: partial batch blocks must stay sublane-aligned.
    assert num_b_blocks == 1 or bB % 8 == 0, "bB must be a multiple of 8 when splitting"

    f32 = jnp.float32
    state = state.astype(f32)

    # Hoist the action branch of layer 1 out of the serially-dependent rollout: one big XLA
    # einsum, emitted time-major and already in the MXU operand dtype.
    a_proj = (jnp.einsum("bta,ah->tbh", actions.astype(f32), params["w1a"].astype(f32),
                         preferred_element_type=f32)
              + params["b1"].astype(f32)).astype(compute_dtype)

    if targets_time_major:
        tgt_tm = targets.astype(compute_dtype)               # already (T, B, S)
    else:
        # TODO(synk): provide targets time-major upstream to avoid this (T*B*S) transpose.
        tgt_tm = jnp.transpose(targets, (1, 0, 2)).astype(compute_dtype)

    # discount**t table (exact Python-float pow, matching `self.discount ** step`).
    disc_tbl = jnp.asarray([float(discount) ** t for t in range(T)], dtype=f32)

    w1s = params["w1s"].astype(compute_dtype)
    w2 = params["w2"].astype(compute_dtype)
    w3 = params["w3"].astype(compute_dtype)
    b2 = params["b2"].astype(f32).reshape(1, H)
    b3 = params["b3"].astype(f32).reshape(1, S)

    cbytes = jnp.dtype(compute_dtype).itemsize
    flops = 2 * T * B * (S * H + H * H + H * S)
    bytes_accessed = (4 * B * S                              # initial state
                      + cbytes * T * B * (H + S)             # a_proj + targets
                      + cbytes * (S * H + H * H + H * S)     # weights
                      + 4 * (H + S)                          # biases
                      + 4 * B * S + 4 * T)                   # acc out + discount table

    # TODO(synk): for very large T on v7x (64 MiB VMEM), chunk a_proj/targets over t with an
    # inner pltpu.emit_pipeline instead of keeping the whole (T,bB,*) slabs resident.
    acc = pl.pallas_call(
        multistep_loss_kernel,
        out_shape=jax.ShapeDtypeStruct((B, S), f32),
        grid_spec=pltpu.PrefetchScalarGridSpec(
            num_scalar_prefetch=1,                           # disc_tbl -> SMEM
            grid=(num_b_blocks,),
            in_specs=[
                pl.BlockSpec((bB, S), lambda b, d: (b, 0)),          # initial state
                pl.BlockSpec((T, bB, H), lambda b, d: (0, b, 0)),    # a_proj (time-major)
                pl.BlockSpec((T, bB, S), lambda b, d: (0, b, 0)),    # targets (time-major)
                pl.BlockSpec((S, H), lambda b, d: (0, 0), **_SINGLE_BUFFER),  # w1s
                pl.BlockSpec((H, H), lambda b, d: (0, 0), **_SINGLE_BUFFER),  # w2
                pl.BlockSpec((1, H), lambda b, d: (0, 0), **_SINGLE_BUFFER),  # b2
                pl.BlockSpec((H, S), lambda b, d: (0, 0), **_SINGLE_BUFFER),  # w3
                pl.BlockSpec((1, S), lambda b, d: (0, 0), **_SINGLE_BUFFER),  # b3
            ],
            out_specs=pl.BlockSpec((bB, S), lambda b, d: (b, 0)),
        ),
        compiler_params=pltpu.CompilerParams(
            dimension_semantics=("parallel",),               # batch blocks -> TCs on v7x
            vmem_limit_bytes=_vmem_limit_bytes(),
        ),
        cost_estimate=pl.CostEstimate(flops=flops, transcendentals=0,
                                      bytes_accessed=bytes_accessed),
    )(disc_tbl, state, a_proj, tgt_tm, w1s, w2, b2, w3, b3)

    # MSE(reduction='mean') per step == elementwise sum / (B*S); one reduction at the end,
    # done by XLA on the tiny (B,S) accumulator output.
    return jnp.sum(acc) / (B * S)


def multi_step_loss_ref(state, actions, targets, params, discount=0.99):
    """Pure-JAX reference mirroring the PyTorch forward."""
    pred = state.astype(jnp.float32)
    total = jnp.float32(0.0)
    T = actions.shape[1]
    for step in range(T):
        a = actions[:, step, :]
        h = jnp.maximum(pred @ params["w1s"] + a @ params["w1a"] + params["b1"], 0.0)
        h = jnp.maximum(h @ params["w2"] + params["b2"], 0.0)
        pred = h @ params["w3"] + params["b3"]
        total = total + (discount ** step) * jnp.mean((pred - targets[:, step, :]) ** 2)
    return total


def init_params(key, state_dim, action_dim, hidden):
    ks = jax.random.split(key, 6)
    scale = 0.1
    return {
        "w1s": scale * jax.random.normal(ks[0], (state_dim, hidden), jnp.float32),
        "w1a": scale * jax.random.normal(ks[1], (action_dim, hidden), jnp.float32),
        "b1": jnp.zeros((1, hidden), jnp.float32),
        "w2": scale * jax.random.normal(ks[2], (hidden, hidden), jnp.float32),
        "b2": jnp.zeros((1, hidden), jnp.float32),
        "w3": scale * jax.random.normal(ks[3], (hidden, state_dim), jnp.float32),
        "b3": jnp.zeros((1, state_dim), jnp.float32),
    }


if __name__ == "__main__":
    B, T, S, A, H = 2, 8, 4, 4, 32
    discount = 0.99

    key = jax.random.PRNGKey(0)
    k_state, k_act, k_tgt, k_params = jax.random.split(key, 4)

    state = jax.random.normal(k_state, (B, S), jnp.float32)
    actions = jax.random.normal(k_act, (B, T, A), jnp.float32)
    target_states = jax.random.normal(k_tgt, (B, T, S), jnp.float32)
    params = init_params(k_params, S, A, H)

    loss_ref = multi_step_loss_ref(state, actions, target_states, params, discount)

    # Exact path (f32 MXU operands): matches the PyTorch f32 forward.
    loss_f32 = jax.block_until_ready(
        multi_step_loss(state, actions, target_states, params, discount,
                        compute_dtype=jnp.float32))
    assert jnp.allclose(loss_f32, loss_ref, rtol=1e-4, atol=1e-5), (loss_f32, loss_ref)

    # Default perf path (bf16 MXU operands, f32 carries/accumulator).
    loss_bf16 = jax.block_until_ready(
        multi_step_loss(state, actions, target_states, params, discount))
    assert jnp.allclose(loss_bf16, loss_ref, rtol=3e-2, atol=1e-3), (loss_bf16, loss_ref)

    print("KERNEL_OK")
</pallas_src>

<mosaic_0001>
module attributes {stable_mosaic.version = 11 : i64} {
  func.func @multistep_loss_kernel(%arg0: i32, %arg1: memref<8xf32, #tpu.memory_space<smem>>, %arg2: memref<2x4xf32, #tpu.memory_space<vmem>>, %arg3: memref<8x2x32xf32, #tpu.memory_space<vmem>>, %arg4: memref<8x2x4xf32, #tpu.memory_space<vmem>>, %arg5: memref<4x32xf32, #tpu.memory_space<vmem>>, %arg6: memref<32x32xf32, #tpu.memory_space<vmem>>, %arg7: memref<1x32xf32, #tpu.memory_space<vmem>>, %arg8: memref<32x4xf32, #tpu.memory_space<vmem>>, %arg9: memref<1x4xf32, #tpu.memory_space<vmem>>, %arg10: memref<2x4xf32, #tpu.memory_space<vmem>>) attributes {dimension_semantics = [#tpu.dimension_semantics<parallel>], iteration_bounds = array<i64: 1>, scalar_prefetch = 1 : i64, scratch_operands = 0 : i64, tpu.core_type = #tpu.core_type<tc>, window_params = [{transform_indices = @transform_0, window_bounds = array<i64: 2, 4>}, {transform_indices = @transform_1, window_bounds = array<i64: 8, 2, 32>}, {transform_indices = @transform_2, window_bounds = array<i64: 8, 2, 4>}, {pipeline_mode = #tpu.pipeline_mode<synchronous>, transform_indices = @transform_3, window_bounds = array<i64: 4, 32>}, {pipeline_mode = #tpu.pipeline_mode<synchronous>, transform_indices = @transform_4, window_bounds = array<i64: 32, 32>}, {pipeline_mode = #tpu.pipeline_mode<synchronous>, transform_indices = @transform_5, window_bounds = array<i64: 1, 32>}, {pipeline_mode = #tpu.pipeline_mode<synchronous>, transform_indices = @transform_6, window_bounds = array<i64: 32, 4>}, {pipeline_mode = #tpu.pipeline_mode<synchronous>, transform_indices = @transform_7, window_bounds = array<i64: 1, 4>}, {transform_indices = @transform_8, window_bounds = array<i64: 2, 4>}]} {
    %c0 = arith.constant 0 : index
    %c0_0 = arith.constant 0 : index
    %0 = vector.load %arg2[%c0, %c0_0] : memref<2x4xf32, #tpu.memory_space<vmem>>, vector<2x4xf32>
    %cst = arith.constant 0.000000e+00 : f32
    %1 = vector.broadcast %cst : f32 to vector<2x4xf32>
    %c0_i32 = arith.constant 0 : i32
    %c0_1 = arith.constant 0 : index
    %c0_2 = arith.constant 0 : index
    %2 = vector.load %arg5[%c0_1, %c0_2] : memref<4x32xf32, #tpu.memory_space<vmem>>, vector<4x32xf32>
    %cst_3 = arith.constant dense<0.000000e+00> : vector<2x32xf32>
    %3 = tpu.matmul %0, %2, %cst_3 {dimension_numbers = #tpu.dot_dimension_numbers<[1], [0], [0], [1], [0, 0, 1, 1], [], []>} : vector<2x4xf32>, vector<4x32xf32>, vector<2x32xf32> -> vector<2x32xf32>
    %4 = arith.index_cast %c0_i32 : i32 to index
    %c0_4 = arith.constant 0 : index
    %c0_5 = arith.constant 0 : index
    %5 = vector.load %arg3[%4, %c0_4, %c0_5] : memref<8x2x32xf32, #tpu.memory_space<vmem>>, vector<1x2x32xf32>
    %6 = vector.shape_cast %5 : vector<1x2x32xf32> to vector<2x32xf32>
    %7 = arith.addf %3, %6 : vector<2x32xf32>
    %cst_6 = arith.constant 0.000000e+00 : f32
    %8 = vector.broadcast %cst_6 : f32 to vector<2x32xf32>
    %9 = arith.maximumf %7, %8 : vector<2x32xf32>
    %c0_7 = arith.constant 0 : index
    %c0_8 = arith.constant 0 : index
    %10 = vector.load %arg6[%c0_7, %c0_8] : memref<32x32xf32, #tpu.memory_space<vmem>>, vector<32x32xf32>
    %cst_9 = arith.constant dense<0.000000e+00> : vector<2x32xf32>
    %11 = tpu.matmul %9, %10, %cst_9 {dimension_numbers = #tpu.dot_dimension_numbers<[1], [0], [0], [1], [0, 0, 1, 1], [], []>} : vector<2x32xf32>, vector<32x32xf32>, vector<2x32xf32> -> vector<2x32xf32>
    %c0_10 = arith.constant 0 : index
    %c0_11 = arith.constant 0 : index
    %12 = vector.load %arg7[%c0_10, %c0_11] : memref<1x32xf32, #tpu.memory_space<vmem>>, vector<1x32xf32>
    %13 = vector.broadcast %12 : vector<1x32xf32> to vector<2x32xf32>
    %14 = arith.addf %11, %13 : vector<2x32xf32>
    %cst_12 = arith.constant 0.000000e+00 : f32
    %15 = vector.broadcast %cst_12 : f32 to vector<2x32xf32>
    %16 = arith.maximumf %14, %15 : vector<2x32xf32>
    %c0_13 = arith.constant 0 : index
    %c0_14 = arith.constant 0 : index
    %17 = vector.load %arg8[%c0_13, %c0_14] : memref<32x4xf32, #tpu.memory_space<vmem>>, vector<32x4xf32>
    %cst_15 = arith.constant dense<0.000000e+00> : vector<2x4xf32>
    %18 = tpu.matmul %16, %17, %cst_15 {dimension_numbers = #tpu.dot_dimension_numbers<[1], [0], [0], [1], [0, 0, 1, 1], [], []>} : vector<2x32xf32>, vector<32x4xf32>, vector<2x4xf32> -> vector<2x4xf32>
    %c0_16 = arith.constant 0 : index
    %c0_17 = arith.constant 0 : index
    %19 = vector.load %arg9[%c0_16, %c0_17] : memref<1x4xf32, #tpu.memory_space<vmem>>, vector<1x4xf32>
    %20 = vector.broadcast %19 : vector<1x4xf32> to vector<2x4xf32>
    %21 = arith.addf %18, %20 : vector<2x4xf32>
    %22 = arith.index_cast %c0_i32 : i32 to index
    %c0_18 = arith.constant 0 : index
    %c0_19 = arith.constant 0 : index
    %23 = vector.load %arg4[%22, %c0_18, %c0_19] : memref<8x2x4xf32, #tpu.memory_space<vmem>>, vector<1x2x4xf32>
    %24 = vector.shape_cast %23 : vector<1x2x4xf32> to vector<2x4xf32>
    %25 = arith.subf %21, %24 : vector<2x4xf32>
    %26 = arith.index_cast %c0_i32 : i32 to index
    %27 = memref.load %arg1[%26] : memref<8xf32, #tpu.memory_space<smem>>
    %28 = arith.mulf %25, %25 : vector<2x4xf32>
    %29 = vector.broadcast %27 : f32 to vector<2x4xf32>
    %30 = arith.mulf %29, %28 : vector<2x4xf32>
    %31 = arith.addf %1, %30 : vector<2x4xf32>
    %c1_i32 = arith.constant 1 : i32
    %c0_20 = arith.constant 0 : index
    %c0_21 = arith.constant 0 : index
    %32 = vector.load %arg5[%c0_20, %c0_21] : memref<4x32xf32, #tpu.memory_space<vmem>>, vector<4x32xf32>
    %cst_22 = arith.constant dense<0.000000e+00> : vector<2x32xf32>
    %33 = tpu.matmul %21, %32, %cst_22 {dimension_numbers = #tpu.dot_dimension_numbers<[1], [0], [0], [1], [0, 0, 1, 1], [], []>} : vector<2x4xf32>, vector<4x32xf32>, vector<2x32xf32> -> vector<2x32xf32>
    %34 = arith.index_cast %c1_i32 : i32 to index
    %c0_23 = arith.constant 0 : index
    %c0_24 = arith.constant 0 : index
    %35 = vector.load %arg3[%34, %c0_23, %c0_24] : memref<8x2x32xf32, #tpu.memory_space<vmem>>, vector<1x2x32xf32>
    %36 = vector.shape_cast %35 : vector<1x2x32xf32> to vector<2x32xf32>
    %37 = arith.addf %33, %36 : vector<2x32xf32>
    %cst_25 = arith.constant 0.000000e+00 : f32
    %38 = vector.broadcast %cst_25 : f32 to vector<2x32xf32>
    %39 = arith.maximumf %37, %38 : vector<2x32xf32>
    %c0_26 = arith.constant 0 : index
    %c0_27 = arith.constant 0 : index
    %40 = vector.load %arg6[%c0_26, %c0_27] : memref<32x32xf32, #tpu.memory_space<vmem>>, vector<32x32xf32>
    %cst_28 = arith.constant dense<0.000000e+00> : vector<2x32xf32>
    %41 = tpu.matmul %39, %40, %cst_28 {dimension_numbers = #tpu.dot_dimension_numbers<[1], [0], [0], [1], [0, 0, 1, 1], [], []>} : vector<2x32xf32>, vector<32x32xf32>, vector<2x32xf32> -> vector<2x32xf32>
    %c0_29 = arith.constant 0 : index
    %c0_30 = arith.constant 0 : index
    %42 = vector.load %arg7[%c0_29, %c0_30] : memref<1x32xf32, #tpu.memory_space<vmem>>, vector<1x32xf32>
    %43 = vector.broadcast %42 : vector<1x32xf32> to vector<2x32xf32>
    %44 = arith.addf %41, %43 : vector<2x32xf32>
    %cst_31 = arith.constant 0.000000e+00 : f32
    %45 = vector.broadcast %cst_31 : f32 to vector<2x32xf32>
    %46 = arith.maximumf %44, %45 : vector<2x32xf32>
    %c0_32 = arith.constant 0 : index
    %c0_33 = arith.constant 0 : index
    %47 = vector.load %arg8[%c0_32, %c0_33] : memref<32x4xf32, #tpu.memory_space<vmem>>, vector<32x4xf32>
    %cst_34 = arith.constant dense<0.000000e+00> : vector<2x4xf32>
    %48 = tpu.matmul %46, %47, %cst_34 {dimension_numbers = #tpu.dot_dimension_numbers<[1], [0], [0], [1], [0, 0, 1, 1], [], []>} : vector<2x32xf32>, vector<32x4xf32>, vector<2x4xf32> -> vector<2x4xf32>
    %c0_35 = arith.constant 0 : index
    %c0_36 = arith.constant 0 : index
    %49 = vector.load %arg9[%c0_35, %c0_36] : memref<1x4xf32, #tpu.memory_space<vmem>>, vector<1x4xf32>
    %50 = vector.broadcast %49 : vector<1x4xf32> to vector<2x4xf32>
    %51 = arith.addf %48, %50 : vector<2x4xf32>
    %52 = arith.index_cast %c1_i32 : i32 to index
    %c0_37 = arith.constant 0 : index
    %c0_38 = arith.constant 0 : index
    %53 = vector.load %arg4[%52, %c0_37, %c0_38] : memref<8x2x4xf32, #tpu.memory_space<vmem>>, vector<1x2x4xf32>
    %54 = vector.shape_cast %53 : vector<1x2x4xf32> to vector<2x4xf32>
    %55 = arith.subf %51, %54 : vector<2x4xf32>
    %56 = arith.index_cast %c1_i32 : i32 to index
    %57 = memref.load %arg1[%56] : memref<8xf32, #tpu.memory_space<smem>>
    %58 = arith.mulf %55, %55 : vector<2x4xf32>
    %59 = vector.broadcast %57 : f32 to vector<2x4xf32>
    %60 = arith.mulf %59, %58 : vector<2x4xf32>
    %61 = arith.addf %31, %60 : vector<2x4xf32>
    %c2_i32 = arith.constant 2 : i32
    %c0_39 = arith.constant 0 : index
    %c0_40 = arith.constant 0 : index
    %62 = vector.load %arg5[%c0_39, %c0_40] : memref<4x32xf32, #tpu.memory_space<vmem>>, vector<4x32xf32>
    %cst_41 = arith.constant dense<0.000000e+00> : vector<2x32xf32>
    %63 = tpu.matmul %51, %62, %cst_41 {dimension_numbers = #tpu.dot_dimension_numbers<[1], [0], [0], [1], [0, 0, 1, 1], [], []>} : vector<2x4xf32>, vector<4x32xf32>, vector<2x32xf32> -> vector<2x32xf32>
    %64 = arith.index_cast %c2_i32 : i32 to index
    %c0_42 = arith.constant 0 : index
    %c0_43 = arith.constant 0 : index
    %65 = vector.load %arg3[%64, %c0_42, %c0_43] : memref<8x2x32xf32, #tpu.memory_space<vmem>>, vector<1x2x32xf32>
    %66 = vector.shape_cast %65 : vector<1x2x32xf32> to vector<2x32xf32>
    %67 = arith.addf %63, %66 : vector<2x32xf32>
    %cst_44 = arith.constant 0.000000e+00 : f32
    %68 = vector.broadcast %cst_44 : f32 to vector<2x32xf32>
    %69 = arith.maximumf %67, %68 : vector<2x32xf32>
    %c0_45 = arith.constant 0 : index
    %c0_46 = arith.constant 0 : index
    %70 = vector.load %arg6[%c0_45, %c0_46] : memref<32x32xf32, #tpu.memory_space<vmem>>, vector<32x32xf32>
    %cst_47 = arith.constant dense<0.000000e+00> : vector<2x32xf32>
    %71 = tpu.matmul %69, %70, %cst_47 {dimension_numbers = #tpu.dot_dimension_numbers<[1], [0], [0], [1], [0, 0, 1, 1], [], []>} : vector<2x32xf32>, vector<32x32xf32>, vector<2x32xf32> -> vector<2x32xf32>
    %c0_48 = arith.constant 0 : index
    %c0_49 = arith.constant 0 : index
    %72 = vector.load %arg7[%c0_48, %c0_49] : memref<1x32xf32, #tpu.memory_space<vmem>>, vector<1x32xf32>
    %73 = vector.broadcast %72 : vector<1x32xf32> to vector<2x32xf32>
    %74 = arith.addf %71, %73 : vector<2x32xf32>
    %cst_50 = arith.constant 0.000000e+00 : f32
    %75 = vector.broadcast %cst_50 : f32 to vector<2x32xf32>
    %76 = arith.maximumf %74, %75 : vector<2x32xf32>
    %c0_51 = arith.constant 0 : index
    %c0_52 = arith.constant 0 : index
    %77 = vector.load %arg8[%c0_51, %c0_52] : memref<32x4xf32, #tpu.memory_space<vmem>>, vector<32x4xf32>
    %cst_53 = arith.constant dense<0.000000e+00> : vector<2x4xf32>
    %78 = tpu.matmul %76, %77, %cst_53 {dimension_numbers = #tpu.dot_dimension_numbers<[1], [0], [0], [1], [0, 0, 1, 1], [], []>} : vector<2x32xf32>, vector<32x4xf32>, vector<2x4xf32> -> vector<2x4xf32>
    %c0_54 = arith.constant 0 : index
    %c0_55 = arith.constant 0 : index
    %79 = vector.load %arg9[%c0_54, %c0_55] : memref<1x4xf32, #tpu.memory_space<vmem>>, vector<1x4xf32>
    %80 = vector.broadcast %79 : vector<1x4xf32> to vector<2x4xf32>
    %81 = arith.addf %78, %80 : vector<2x4xf32>
    %82 = arith.index_cast %c2_i32 : i32 to index
    %c0_56 = arith.constant 0 : index
    %c0_57 = arith.constant 0 : index
    %83 = vector.load %arg4[%82, %c0_56, %c0_57] : memref<8x2x4xf32, #tpu.memory_space<vmem>>, vector<1x2x4xf32>
    %84 = vector.shape_cast %83 : vector<1x2x4xf32> to vector<2x4xf32>
    %85 = arith.subf %81, %84 : vector<2x4xf32>
    %86 = arith.index_cast %c2_i32 : i32 to index
    %87 = memref.load %arg1[%86] : memref<8xf32, #tpu.memory_space<smem>>
    %88 = arith.mulf %85, %85 : vector<2x4xf32>
    %89 = vector.broadcast %87 : f32 to vector<2x4xf32>
    %90 = arith.mulf %89, %88 : vector<2x4xf32>
    %91 = arith.addf %61, %90 : vector<2x4xf32>
    %c3_i32 = arith.constant 3 : i32
    %c0_58 = arith.constant 0 : index
    %c0_59 = arith.constant 0 : index
    %92 = vector.load %arg5[%c0_58, %c0_59] : memref<4x32xf32, #tpu.memory_space<vmem>>, vector<4x32xf32>
    %cst_60 = arith.constant dense<0.000000e+00> : vector<2x32xf32>
    %93 = tpu.matmul %81, %92, %cst_60 {dimension_numbers = #tpu.dot_dimension_numbers<[1], [0], [0], [1], [0, 0, 1, 1], [], []>} : vector<2x4xf32>, vector<4x32xf32>, vector<2x32xf32> -> vector<2x32xf32>
    %94 = arith.index_cast %c3_i32 : i32 to index
    %c0_61 = arith.constant 0 : index
    %c0_62 = arith.constant 0 : index
    %95 = vector.load %arg3[%94, %c0_61, %c0_62] : memref<8x2x32xf32, #tpu.memory_space<vmem>>, vector<1x2x32xf32>
    %96 = vector.shape_cast %95 : vector<1x2x32xf32> to vector<2x32xf32>
    %97 = arith.addf %93, %96 : vector<2x32xf32>
    %cst_63 = arith.constant 0.000000e+00 : f32
    %98 = vector.broadcast %cst_63 : f32 to vector<2x32xf32>
    %99 = arith.maximumf %97, %98 : vector<2x32xf32>
    %c0_64 = arith.constant 0 : index
    %c0_65 = arith.constant 0 : index
    %100 = vector.load %arg6[%c0_64, %c0_65] : memref<32x32xf32, #tpu.memory_space<vmem>>, vector<32x32xf32>
    %cst_66 = arith.constant dense<0.000000e+00> : vector<2x32xf32>
    %101 = tpu.matmul %99, %100, %cst_66 {dimension_numbers = #tpu.dot_dimension_numbers<[1], [0], [0], [1], [0, 0, 1, 1], [], []>} : vector<2x32xf32>, vector<32x32xf32>, vector<2x32xf32> -> vector<2x32xf32>
    %c0_67 = arith.constant 0 : index
    %c0_68 = arith.constant 0 : index
    %102 = vector.load %arg7[%c0_67, %c0_68] : memref<1x32xf32, #tpu.memory_space<vmem>>, vector<1x32xf32>
    %103 = vector.broadcast %102 : vector<1x32xf32> to vector<2x32xf32>
    %104 = arith.addf %101, %103 : vector<2x32xf32>
    %cst_69 = arith.constant 0.000000e+00 : f32
    %105 = vector.broadcast %cst_69 : f32 to vector<2x32xf32>
    %106 = arith.maximumf %104, %105 : vector<2x32xf32>
    %c0_70 = arith.constant 0 : index
    %c0_71 = arith.constant 0 : index
    %107 = vector.load %arg8[%c0_70, %c0_71] : memref<32x4xf32, #tpu.memory_space<vmem>>, vector<32x4xf32>
    %cst_72 = arith.constant dense<0.000000e+00> : vector<2x4xf32>
    %108 = tpu.matmul %106, %107, %cst_72 {dimension_numbers = #tpu.dot_dimension_numbers<[1], [0], [0], [1], [0, 0, 1, 1], [], []>} : vector<2x32xf32>, vector<32x4xf32>, vector<2x4xf32> -> vector<2x4xf32>
    %c0_73 = arith.constant 0 : index
    %c0_74 = arith.constant 0 : index
    %109 = vector.load %arg9[%c0_73, %c0_74] : memref<1x4xf32, #tpu.memory_space<vmem>>, vector<1x4xf32>
    %110 = vector.broadcast %109 : vector<1x4xf32> to vector<2x4xf32>
    %111 = arith.addf %108, %110 : vector<2x4xf32>
    %112 = arith.index_cast %c3_i32 : i32 to index
    %c0_75 = arith.constant 0 : index
    %c0_76 = arith.constant 0 : index
    %113 = vector.load %arg4[%112, %c0_75, %c0_76] : memref<8x2x4xf32, #tpu.memory_space<vmem>>, vector<1x2x4xf32>
    %114 = vector.shape_cast %113 : vector<1x2x4xf32> to vector<2x4xf32>
    %115 = arith.subf %111, %114 : vector<2x4xf32>
    %116 = arith.index_cast %c3_i32 : i32 to index
    %117 = memref.load %arg1[%116] : memref<8xf32, #tpu.memory_space<smem>>
    %118 = arith.mulf %115, %115 : vector<2x4xf32>
    %119 = vector.broadcast %117 : f32 to vector<2x4xf32>
    %120 = arith.mulf %119, %118 : vector<2x4xf32>
    %121 = arith.addf %91, %120 : vector<2x4xf32>
    %c4_i32 = arith.constant 4 : i32
    %c0_77 = arith.constant 0 : index
    %c0_78 = arith.constant 0 : index
    %122 = vector.load %arg5[%c0_77, %c0_78] : memref<4x32xf32, #tpu.memory_space<vmem>>, vector<4x32xf32>
    %cst_79 = arith.constant dense<0.000000e+00> : vector<2x32xf32>
    %123 = tpu.matmul %111, %122, %cst_79 {dimension_numbers = #tpu.dot_dimension_numbers<[1], [0], [0], [1], [0, 0, 1, 1], [], []>} : vector<2x4xf32>, vector<4x32xf32>, vector<2x32xf32> -> vector<2x32xf32>
    %124 = arith.index_cast %c4_i32 : i32 to index
    %c0_80 = arith.constant 0 : index
    %c0_81 = arith.constant 0 : index
    %125 = vector.load %arg3[%124, %c0_80, %c0_81] : memref<8x2x32xf32, #tpu.memory_space<vmem>>, vector<1x2x32xf32>
    %126 = vector.shape_cast %125 : vector<1x2x32xf32> to vector<2x32xf32>
    %127 = arith.addf %123, %126 : vector<2x32xf32>
    %cst_82 = arith.constant 0.000000e+00 : f32
    %128 = vector.broadcast %cst_82 : f32 to vector<2x32xf32>
    %129 = arith.maximumf %127, %128 : vector<2x32xf32>
    %c0_83 = arith.constant 0 : index
    %c0_84 = arith.constant 0 : index
    %130 = vector.load %arg6[%c0_83, %c0_84] : memref<32x32xf32, #tpu.memory_space<vmem>>, vector<32x32xf32>
    %cst_85 = arith.constant dense<0.000000e+00> : vector<2x32xf32>
    %131 = tpu.matmul %129, %130, %cst_85 {dimension_numbers = #tpu.dot_dimension_numbers<[1], [0], [0], [1], [0, 0, 1, 1], [], []>} : vector<2x32xf32>, vector<32x32xf32>, vector<2x32xf32> -> vector<2x32xf32>
    %c0_86 = arith.constant 0 : index
    %c0_87 = arith.constant 0 : index
    %132 = vector.load %arg7[%c0_86, %c0_87] : memref<1x32xf32, #tpu.memory_space<vmem>>, vector<1x32xf32>
    %133 = vector.broadcast %132 : vector<1x32xf32> to vector<2x32xf32>
    %134 = arith.addf %131, %133 : vector<2x32xf32>
    %cst_88 = arith.constant 0.000000e+00 : f32
    %135 = vector.broadcast %cst_88 : f32 to vector<2x32xf32>
    %136 = arith.maximumf %134, %135 : vector<2x32xf32>
    %c0_89 = arith.constant 0 : index
    %c0_90 = arith.constant 0 : index
    %137 = vector.load %arg8[%c0_89, %c0_90] : memref<32x4xf32, #tpu.memory_space<vmem>>, vector<32x4xf32>
    %cst_91 = arith.constant dense<0.000000e+00> : vector<2x4xf32>
    %138 = tpu.matmul %136, %137, %cst_91 {dimension_numbers = #tpu.dot_dimension_numbers<[1], [0], [0], [1], [0, 0, 1, 1], [], []>} : vector<2x32xf32>, vector<32x4xf32>, vector<2x4xf32> -> vector<2x4xf32>
    %c0_92 = arith.constant 0 : index
    %c0_93 = arith.constant 0 : index
    %139 = vector.load %arg9[%c0_92, %c0_93] : memref<1x4xf32, #tpu.memory_space<vmem>>, vector<1x4xf32>
    %140 = vector.broadcast %139 : vector<1x4xf32> to vector<2x4xf32>
    %141 = arith.addf %138, %140 : vector<2x4xf32>
    %142 = arith.index_cast %c4_i32 : i32 to index
    %c0_94 = arith.constant 0 : index
    %c0_95 = arith.constant 0 : index
    %143 = vector.load %arg4[%142, %c0_94, %c0_95] : memref<8x2x4xf32, #tpu.memory_space<vmem>>, vector<1x2x4xf32>
    %144 = vector.shape_cast %143 : vector<1x2x4xf32> to vector<2x4xf32>
    %145 = arith.subf %141, %144 : vector<2x4xf32>
    %146 = arith.index_cast %c4_i32 : i32 to index
    %147 = memref.load %arg1[%146] : memref<8xf32, #tpu.memory_space<smem>>
    %148 = arith.mulf %145, %145 : vector<2x4xf32>
    %149 = vector.broadcast %147 : f32 to vector<2x4xf32>
    %150 = arith.mulf %149, %148 : vector<2x4xf32>
    %151 = arith.addf %121, %150 : vector<2x4xf32>
    %c5_i32 = arith.constant 5 : i32
    %c0_96 = arith.constant 0 : index
    %c0_97 = arith.constant 0 : index
    %152 = vector.load %arg5[%c0_96, %c0_97] : memref<4x32xf32, #tpu.memory_space<vmem>>, vector<4x32xf32>
    %cst_98 = arith.constant dense<0.000000e+00> : vector<2x32xf32>
    %153 = tpu.matmul %141, %152, %cst_98 {dimension_numbers = #tpu.dot_dimension_numbers<[1], [0], [0], [1], [0, 0, 1, 1], [], []>} : vector<2x4xf32>, vector<4x32xf32>, vector<2x32xf32> -> vector<2x32xf32>
    %154 = arith.index_cast %c5_i32 : i32 to index
    %c0_99 = arith.constant 0 : index
    %c0_100 = arith.constant 0 : index
    %155 = vector.load %arg3[%154, %c0_99, %c0_100] : memref<8x2x32xf32, #tpu.memory_space<vmem>>, vector<1x2x32xf32>
    %156 = vector.shape_cast %155 : vector<1x2x32xf32> to vector<2x32xf32>
    %157 = arith.addf %153, %156 : vector<2x32xf32>
    %cst_101 = arith.constant 0.000000e+00 : f32
    %158 = vector.broadcast %cst_101 : f32 to vector<2x32xf32>
    %159 = arith.maximumf %157, %158 : vector<2x32xf32>
    %c0_102 = arith.constant 0 : index
    %c0_103 = arith.constant 0 : index
    %160 = vector.load %arg6[%c0_102, %c0_103] : memref<32x32xf32, #tpu.memory_space<vmem>>, vector<32x32xf32>
    %cst_104 = arith.constant dense<0.000000e+00> : vector<2x32xf32>
    %161 = tpu.matmul %159, %160, %cst_104 {dimension_numbers = #tpu.dot_dimension_numbers<[1], [0], [0], [1], [0, 0, 1, 1], [], []>} : vector<2x32xf32>, vector<32x32xf32>, vector<2x32xf32> -> vector<2x32xf32>
    %c0_105 = arith.constant 0 : index
    %c0_106 = arith.constant 0 : index
    %162 = vector.load %arg7[%c0_105, %c0_106] : memref<1x32xf32, #tpu.memory_space<vmem>>, vector<1x32xf32>
    %163 = vector.broadcast %162 : vector<1x32xf32> to vector<2x32xf32>
    %164 = arith.addf %161, %163 : vector<2x32xf32>
    %cst_107 = arith.constant 0.000000e+00 : f32
    %165 = vector.broadcast %cst_107 : f32 to vector<2x32xf32>
    %166 = arith.maximumf %164, %165 : vector<2x32xf32>
    %c0_108 = arith.constant 0 : index
    %c0_109 = arith.constant 0 : index
    %167 = vector.load %arg8[%c0_108, %c0_109] : memref<32x4xf32, #tpu.memory_space<vmem>>, vector<32x4xf32>
    %cst_110 = arith.constant dense<0.000000e+00> : vector<2x4xf32>
    %168 = tpu.matmul %166, %167, %cst_110 {dimension_numbers = #tpu.dot_dimension_numbers<[1], [0], [0], [1], [0, 0, 1, 1], [], []>} : vector<2x32xf32>, vector<32x4xf32>, vector<2x4xf32> -> vector<2x4xf32>
    %c0_111 = arith.constant 0 : index
    %c0_112 = arith.constant 0 : index
    %169 = vector.load %arg9[%c0_111, %c0_112] : memref<1x4xf32, #tpu.memory_space<vmem>>, vector<1x4xf32>
    %170 = vector.broadcast %169 : vector<1x4xf32> to vector<2x4xf32>
    %171 = arith.addf %168, %170 : vector<2x4xf32>
    %172 = arith.index_cast %c5_i32 : i32 to index
    %c0_113 = arith.constant 0 : index
    %c0_114 = arith.constant 0 : index
    %173 = vector.load %arg4[%172, %c0_113, %c0_114] : memref<8x2x4xf32, #tpu.memory_space<vmem>>, vector<1x2x4xf32>
    %174 = vector.shape_cast %173 : vector<1x2x4xf32> to vector<2x4xf32>
    %175 = arith.subf %171, %174 : vector<2x4xf32>
    %176 = arith.index_cast %c5_i32 : i32 to index
    %177 = memref.load %arg1[%176] : memref<8xf32, #tpu.memory_space<smem>>
    %178 = arith.mulf %175, %175 : vector<2x4xf32>
    %179 = vector.broadcast %177 : f32 to vector<2x4xf32>
    %180 = arith.mulf %179, %178 : vector<2x4xf32>
    %181 = arith.addf %151, %180 : vector<2x4xf32>
    %c6_i32 = arith.constant 6 : i32
    %c0_115 = arith.constant 0 : index
    %c0_116 = arith.constant 0 : index
    %182 = vector.load %arg5[%c0_115, %c0_116] : memref<4x32xf32, #tpu.memory_space<vmem>>, vector<4x32xf32>
    %cst_117 = arith.constant dense<0.000000e+00> : vector<2x32xf32>
    %183 = tpu.matmul %171, %182, %cst_117 {dimension_numbers = #tpu.dot_dimension_numbers<[1], [0], [0], [1], [0, 0, 1, 1], [], []>} : vector<2x4xf32>, vector<4x32xf32>, vector<2x32xf32> -> vector<2x32xf32>
    %184 = arith.index_cast %c6_i32 : i32 to index
    %c0_118 = arith.constant 0 : index
    %c0_119 = arith.constant 0 : index
    %185 = vector.load %arg3[%184, %c0_118, %c0_119] : memref<8x2x32xf32, #tpu.memory_space<vmem>>, vector<1x2x32xf32>
    %186 = vector.shape_cast %185 : vector<1x2x32xf32> to vector<2x32xf32>
    %187 = arith.addf %183, %186 : vector<2x32xf32>
    %cst_120 = arith.constant 0.000000e+00 : f32
    %188 = vector.broadcast %cst_120 : f32 to vector<2x32xf32>
    %189 = arith.maximumf %187, %188 : vector<2x32xf32>
    %c0_121 = arith.constant 0 : index
    %c0_122 = arith.constant 0 : index
    %190 = vector.load %arg6[%c0_121, %c0_122] : memref<32x32xf32, #tpu.memory_space<vmem>>, vector<32x32xf32>
    %cst_123 = arith.constant dense<0.000000e+00> : vector<2x32xf32>
    %191 = tpu.matmul %189, %190, %cst_123 {dimension_numbers = #tpu.dot_dimension_numbers<[1], [0], [0], [1], [0, 0, 1, 1], [], []>} : vector<2x32xf32>, vector<32x32xf32>, vector<2x32xf32> -> vector<2x32xf32>
    %c0_124 = arith.constant 0 : index
    %c0_125 = arith.constant 0 : index
    %192 = vector.load %arg7[%c0_124, %c0_125] : memref<1x32xf32, #tpu.memory_space<vmem>>, vector<1x32xf32>
    %193 = vector.broadcast %192 : vector<1x32xf32> to vector<2x32xf32>
    %194 = arith.addf %191, %193 : vector<2x32xf32>
    %cst_126 = arith.constant 0.000000e+00 : f32
    %195 = vector.broadcast %cst_126 : f32 to vector<2x32xf32>
    %196 = arith.maximumf %194, %195 : vector<2x32xf32>
    %c0_127 = arith.constant 0 : index
    %c0_128 = arith.constant 0 : index
    %197 = vector.load %arg8[%c0_127, %c0_128] : memref<32x4xf32, #tpu.memory_space<vmem>>, vector<32x4xf32>
    %cst_129 = arith.constant dense<0.000000e+00> : vector<2x4xf32>
    %198 = tpu.matmul %196, %197, %cst_129 {dimension_numbers = #tpu.dot_dimension_numbers<[1], [0], [0], [1], [0, 0, 1, 1], [], []>} : vector<2x32xf32>, vector<32x4xf32>, vector<2x4xf32> -> vector<2x4xf32>
    %c0_130 = arith.constant 0 : index
    %c0_131 = arith.constant 0 : index
    %199 = vector.load %arg9[%c0_130, %c0_131] : memref<1x4xf32, #tpu.memory_space<vmem>>, vector<1x4xf32>
    %200 = vector.broadcast %199 : vector<1x4xf32> to vector<2x4xf32>
    %201 = arith.addf %198, %200 : vector<2x4xf32>
    %202 = arith.index_cast %c6_i32 : i32 to index
    %c0_132 = arith.constant 0 : index
    %c0_133 = arith.constant 0 : index
    %203 = vector.load %arg4[%202, %c0_132, %c0_133] : memref<8x2x4xf32, #tpu.memory_space<vmem>>, vector<1x2x4xf32>
    %204 = vector.shape_cast %203 : vector<1x2x4xf32> to vector<2x4xf32>
    %205 = arith.subf %201, %204 : vector<2x4xf32>
    %206 = arith.index_cast %c6_i32 : i32 to index
    %207 = memref.load %arg1[%206] : memref<8xf32, #tpu.memory_space<smem>>
    %208 = arith.mulf %205, %205 : vector<2x4xf32>
    %209 = vector.broadcast %207 : f32 to vector<2x4xf32>
    %210 = arith.mulf %209, %208 : vector<2x4xf32>
    %211 = arith.addf %181, %210 : vector<2x4xf32>
    %c7_i32 = arith.constant 7 : i32
    %c0_134 = arith.constant 0 : index
    %c0_135 = arith.constant 0 : index
    %212 = vector.load %arg5[%c0_134, %c0_135] : memref<4x32xf32, #tpu.memory_space<vmem>>, vector<4x32xf32>
    %cst_136 = arith.constant dense<0.000000e+00> : vector<2x32xf32>
    %213 = tpu.matmul %201, %212, %cst_136 {dimension_numbers = #tpu.dot_dimension_numbers<[1], [0], [0], [1], [0, 0, 1, 1], [], []>} : vector<2x4xf32>, vector<4x32xf32>, vector<2x32xf32> -> vector<2x32xf32>
    %214 = arith.index_cast %c7_i32 : i32 to index
    %c0_137 = arith.constant 0 : index
    %c0_138 = arith.constant 0 : index
    %215 = vector.load %arg3[%214, %c0_137, %c0_138] : memref<8x2x32xf32, #tpu.memory_space<vmem>>, vector<1x2x32xf32>
    %216 = vector.shape_cast %215 : vector<1x2x32xf32> to vector<2x32xf32>
    %217 = arith.addf %213, %216 : vector<2x32xf32>
    %cst_139 = arith.constant 0.000000e+00 : f32
    %218 = vector.broadcast %cst_139 : f32 to vector<2x32xf32>
    %219 = arith.maximumf %217, %218 : vector<2x32xf32>
    %c0_140 = arith.constant 0 : index
    %c0_141 = arith.constant 0 : index
    %220 = vector.load %arg6[%c0_140, %c0_141] : memref<32x32xf32, #tpu.memory_space<vmem>>, vector<32x32xf32>
    %cst_142 = arith.constant dense<0.000000e+00> : vector<2x32xf32>
    %221 = tpu.matmul %219, %220, %cst_142 {dimension_numbers = #tpu.dot_dimension_numbers<[1], [0], [0], [1], [0, 0, 1, 1], [], []>} : vector<2x32xf32>, vector<32x32xf32>, vector<2x32xf32> -> vector<2x32xf32>
    %c0_143 = arith.constant 0 : index
    %c0_144 = arith.constant 0 : index
    %222 = vector.load %arg7[%c0_143, %c0_144] : memref<1x32xf32, #tpu.memory_space<vmem>>, vector<1x32xf32>
    %223 = vector.broadcast %222 : vector<1x32xf32> to vector<2x32xf32>
    %224 = arith.addf %221, %223 : vector<2x32xf32>
    %cst_145 = arith.constant 0.000000e+00 : f32
    %225 = vector.broadcast %cst_145 : f32 to vector<2x32xf32>
    %226 = arith.maximumf %224, %225 : vector<2x32xf32>
    %c0_146 = arith.constant 0 : index
    %c0_147 = arith.constant 0 : index
    %227 = vector.load %arg8[%c0_146, %c0_147] : memref<32x4xf32, #tpu.memory_space<vmem>>, vector<32x4xf32>
    %cst_148 = arith.constant dense<0.000000e+00> : vector<2x4xf32>
    %228 = tpu.matmul %226, %227, %cst_148 {dimension_numbers = #tpu.dot_dimension_numbers<[1], [0], [0], [1], [0, 0, 1, 1], [], []>} : vector<2x32xf32>, vector<32x4xf32>, vector<2x4xf32> -> vector<2x4xf32>
    %c0_149 = arith.constant 0 : index
    %c0_150 = arith.constant 0 : index
    %229 = vector.load %arg9[%c0_149, %c0_150] : memref<1x4xf32, #tpu.memory_space<vmem>>, vector<1x4xf32>
    %230 = vector.broadcast %229 : vector<1x4xf32> to vector<2x4xf32>
    %231 = arith.addf %228, %230 : vector<2x4xf32>
    %232 = arith.index_cast %c7_i32 : i32 to index
    %c0_151 = arith.constant 0 : index
    %c0_152 = arith.constant 0 : index
    %233 = vector.load %arg4[%232, %c0_151, %c0_152] : memref<8x2x4xf32, #tpu.memory_space<vmem>>, vector<1x2x4xf32>
    %234 = vector.shape_cast %233 : vector<1x2x4xf32> to vector<2x4xf32>
    %235 = arith.subf %231, %234 : vector<2x4xf32>
    %236 = arith.index_cast %c7_i32 : i32 to index
    %237 = memref.load %arg1[%236] : memref<8xf32, #tpu.memory_space<smem>>
    %238 = arith.mulf %235, %235 : vector<2x4xf32>
    %239 = vector.broadcast %237 : f32 to vector<2x4xf32>
    %240 = arith.mulf %239, %238 : vector<2x4xf32>
    %241 = arith.addf %211, %240 : vector<2x4xf32>
    %c8_i32 = arith.constant 8 : i32
    %c0_153 = arith.constant 0 : index
    %c0_154 = arith.constant 0 : index
    %242 = vector.load %arg10[%c0_153, %c0_154] : memref<2x4xf32, #tpu.memory_space<vmem>>, vector<2x4xf32>
    tpu.vector_store %arg10[%c0_153, %c0_154], %241 {strides = array<i32>} : memref<2x4xf32, #tpu.memory_space<vmem>>, vector<2x4xf32>,
    return
  }
  func.func @transform_0(%arg0: i32, %arg1: memref<8xf32, #tpu.memory_space<smem>>) -> (i32, i32) {
    %c0_i32 = arith.constant 0 : i32
    %c0_i32_0 = arith.constant 0 : i32
    return %arg0, %c0_i32 : i32, i32
  }
  func.func @transform_1(%arg0: i32, %arg1: memref<8xf32, #tpu.memory_space<smem>>) -> (i32, i32, i32) {
    %c0_i32 = arith.constant 0 : i32
    %c0_i32_0 = arith.constant 0 : i32
    %c0_i32_1 = arith.constant 0 : i32
    return %c0_i32, %arg0, %c0_i32_0 : i32, i32, i32
  }
  func.func @transform_2(%arg0: i32, %arg1: memref<8xf32, #tpu.memory_space<smem>>) -> (i32, i32, i32) {
    %c0_i32 = arith.constant 0 : i32
    %c0_i32_0 = arith.constant 0 : i32
    %c0_i32_1 = arith.constant 0 : i32
    return %c0_i32, %arg0, %c0_i32_0 : i32, i32, i32
  }
  func.func @transform_3(%arg0: i32, %arg1: memref<8xf32, #tpu.memory_space<smem>>) -> (i32, i32) {
    %c0_i32 = arith.constant 0 : i32
    %c0_i32_0 = arith.constant 0 : i32
    %c0_i32_1 = arith.constant 0 : i32
    return %c0_i32, %c0_i32_0 : i32, i32
  }
  func.func @transform_4(%arg0: i32, %arg1: memref<8xf32, #tpu.memory_space<smem>>) -> (i32, i32) {
    %c0_i32 = arith.constant 0 : i32
    %c0_i32_0 = arith.constant 0 : i32
    %c0_i32_1 = arith.constant 0 : i32
    return %c0_i32, %c0_i32_0 : i32, i32
  }
  func.func @transform_5(%arg0: i32, %arg1: memref<8xf32, #tpu.memory_space<smem>>) -> (i32, i32) {
    %c0_i32 = arith.constant 0 : i32
    %c0_i32_0 = arith.constant 0 : i32
    %c0_i32_1 = arith.constant 0 : i32
    return %c0_i32, %c0_i32_0 : i32, i32
  }
  func.func @transform_6(%arg0: i32, %arg1: memref<8xf32, #tpu.memory_space<smem>>) -> (i32, i32) {
    %c0_i32 = arith.constant 0 : i32
    %c0_i32_0 = arith.constant 0 : i32
    %c0_i32_1 = arith.constant 0 : i32
    return %c0_i32, %c0_i32_0 : i32, i32
  }
  func.func @transform_7(%arg0: i32, %arg1: memref<8xf32, #tpu.memory_space<smem>>) -> (i32, i32) {
    %c0_i32 = arith.constant 0 : i32
    %c0_i32_0 = arith.constant 0 : i32
    %c0_i32_1 = arith.constant 0 : i32
    return %c0_i32, %c0_i32_0 : i32, i32
  }
  func.func @transform_8(%arg0: i32, %arg1: memref<8xf32, #tpu.memory_space<smem>>) -> (i32, i32) {
    %c0_i32 = arith.constant 0 : i32
    %c0_i32_0 = arith.constant 0 : i32
    return %arg0, %c0_i32 : i32, i32
  }
}

</mosaic_0001>

<llo_original>
// kernel: tpu_custom_call.1
$region0: #{tpu_custom_call.1}
  #allocation0 [shape = 'u32[]', space=smem, size = 0x4, offset = 0x4, fixed_abs, tag = 'smem constant byte address 0x4 - core index']
  #allocation1 [shape = 'u32[144,128]{1,0:T(1,128)}', space=vmem, size = 0x12000, scoped, tag = 'internal scratch']
  #allocation2 [shape = 's32[1]{0}', space=sflag, size = 0x4, scoped, tag = 'scoped memory for tpu_custom_call.1']
  #allocation3 [shape = 'u8[512]{0}', space=smem, size = 0x200, scoped, tag = 'prefetched SMEM operand 0']
  %s0 = inlined_call_operand.vmem [shape: f32[8], index: 0, kind: input, shape index: {}]
  %s1 = inlined_call_operand.vmem [shape: f32[2,4], index: 1, kind: input, shape index: {}]
  %s2 = inlined_call_operand.vmem [shape: f32[8,2,32], index: 2, kind: input, shape index: {}]
  %s3 = inlined_call_operand.vmem [shape: f32[8,2,4], index: 3, kind: input, shape index: {}]
  %s4 = inlined_call_operand.vmem [shape: f32[4,32], index: 4, kind: input, shape index: {}]
  %s5 = inlined_call_operand.vmem [shape: f32[32,32], index: 5, kind: input, shape index: {}]
  %s6 = inlined_call_operand.vmem [shape: f32[1,32], index: 6, kind: input, shape index: {}]
  %s7 = inlined_call_operand.vmem [shape: f32[32,4], index: 7, kind: input, shape index: {}]
  %s8 = inlined_call_operand.vmem [shape: f32[1,4], index: 8, kind: input, shape index: {}]
  %s9 = inlined_call_operand.hbm [shape: f32[2,4], index: 9, kind: output, shape index: {}]
  %s10 = sld [smem:[#allocation0]]
  $region42: #{tpu_custom_call.1} parent=0
    _
  %s12 = ssub.s32 1, %s10
  %s13 = scalar_select 0, %s12, %s10
  %s14 = sshll.u32 %s0, 4
  %s15 = int_to_ptr.vmem [resolvable:$true] %s14
  %17 = dma.vmem_to_smem %s15, 16, [#allocation3], [#allocation2]
  %18 = dma.done [#allocation2], 16
  %19 = sfence
  $region1: #{tpu_custom_call.1} parent=0
    #allocation4 [shape = 'u8[1024]{0}', space=vmem, size = 0x400, scoped, tag = 'output window, operand 0, single buffered']
    #allocation5 [shape = 's32[1]{0}', space=sflag, size = 0x4, scoped, tag = 'scoped memory for tpu_custom_call.1']
    %20 = vsyncpa [#allocation5], 0
    // Predicated region
    $region2: #{tpu_custom_call.1} parent=1 // pred_check
      _
    $region3: #{tpu_custom_call.1} parent=1 // pred_check_branch
      %22 = sbr.rel (0) target = $region5
    $region4: #{tpu_custom_call.1} parent=1 // pred_region
      _
    $region5: #{tpu_custom_call.1} parent=1 // pred_fallthru
      _
    // Predicated region
    $region6: #{tpu_custom_call.1} parent=1 // pred_check
      _
    $region7: #{tpu_custom_call.1} parent=1 // pred_check_branch
      %24 = sbr.rel (0) target = $region9
    $region8: #{tpu_custom_call.1} parent=1 // pred_region
      _
    $region9: #{tpu_custom_call.1} parent=1 // pred_fallthru
      _
    // Predicated region
    $region10: #{tpu_custom_call.1} parent=1 // pred_check
      _
    $region11: #{tpu_custom_call.1} parent=1 // pred_check_branch
      %26 = sbr.rel (0) target = $region13
    $region12: #{tpu_custom_call.1} parent=1 // pred_region
      _
    $region13: #{tpu_custom_call.1} parent=1 // pred_fallthru
      _
    // Predicated region
    $region14: #{tpu_custom_call.1} parent=1 // pred_check
      _
    $region15: #{tpu_custom_call.1} parent=1 // pred_check_branch
      %28 = sbr.rel (0) target = $region17
    $region16: #{tpu_custom_call.1} parent=1 // pred_region
      _
    $region17: #{tpu_custom_call.1} parent=1 // pred_fallthru
      _
    // Predicated region
    $region18: #{tpu_custom_call.1} parent=1 // pred_check
      _
    $region19: #{tpu_custom_call.1} parent=1 // pred_check_branch
      %30 = sbr.rel (0) target = $region21
    $region20: #{tpu_custom_call.1} parent=1 // pred_region
      _
    $region21: #{tpu_custom_call.1} parent=1 // pred_fallthru
      _
    // Predicated region
    $region22: #{tpu_custom_call.1} parent=1 // pred_check
      _
    $region23: #{tpu_custom_call.1} parent=1 // pred_check_branch
      %32 = sbr.rel (0) target = $region25
    $region24: #{tpu_custom_call.1} parent=1 // pred_region
      _
    $region25: #{tpu_custom_call.1} parent=1 // pred_fallthru
      _
    // Predicated region
    $region26: #{tpu_custom_call.1} parent=1 // pred_check
      _
    $region27: #{tpu_custom_call.1} parent=1 // pred_check_branch
      %34 = sbr.rel (0) target = $region29
    $region28: #{tpu_custom_call.1} parent=1 // pred_region
      _
    $region29: #{tpu_custom_call.1} parent=1 // pred_fallthru
      _
    // Predicated region
    $region30: #{tpu_custom_call.1} parent=1 // pred_check
      _
    $region31: #{tpu_custom_call.1} parent=1 // pred_check_branch
      %36 = sbr.rel (0) target = $region33
    $region32: #{tpu_custom_call.1} parent=1 // pred_region
      _
    $region33: #{tpu_custom_call.1} parent=1 // pred_fallthru
      _
    %v37 = vld [vmem:[%s1] sm:$0x3]
    %v38 = vld [vmem:[%s4] sm:$0xf]
    %v39 = vld [vmem:[%s2] sm:$0x3]
    %vm40 = vcmask 31744
    %v42 = vsel %vm40, %v37, 0
    %vm44 = vcmask 1043456
    %v46 = vsel %vm44, %v38, 0
    %48 = vmatprep.subr.mxu0 0.0
    %49 = vmatpush1.msra.mxu0 0.0
    %50 = vmatprep.subr.mxu0 0.0
    %51 = vmatpush1.msra.mxu0 0.0
    %52 = vmatprep.subr.mxu0 0.0
    %53 = vmatpush1.msra.mxu0 0.0
    %54 = vmatprep.subr.mxu0 0.0
    %55 = vmatpush1.msra.mxu0 0.0
    %56 = vmatprep.subr.mxu0 0.0
    %57 = vmatpush1.msra.mxu0 0.0
    %58 = vmatprep.subr.mxu0 0.0
    %59 = vmatpush1.msra.mxu0 0.0
    %60 = vmatprep.subr.mxu0 0.0
    %61 = vmatpush1.msra.mxu0 0.0
    %62 = vmatprep.subr.mxu0 0.0
    %63 = vmatpush1.msra.mxu0 0.0
    %64 = vmatprep.subr.mxu0 0.0
    %65 = vmatpush1.msra.mxu0 0.0
    %66 = vmatprep.subr.mxu0 0.0
    %67 = vmatpush1.msra.mxu0 0.0
    %68 = vmatprep.subr.mxu0 0.0
    %69 = vmatpush1.msra.mxu0 0.0
    %70 = vmatprep.subr.mxu0 0.0
    %71 = vmatpush1.msra.mxu0 0.0
    %72 = vmatprep.subr.mxu0 0.0
    %73 = vmatpush1.msra.mxu0 0.0
    %74 = vmatprep.subr.mxu0 0.0
    %75 = vmatpush1.msra.mxu0 0.0
    %76 = vmatprep.subr.mxu0 0.0
    %77 = vmatpush1.msra.mxu0 0.0
    %78 = vmatprep.subr.mxu0 0.0
    %79 = vmatpush1.msra.mxu0 %v46
    %80 = vmatprep.subr.mxu0 0.0
    %81 = vmatpush2.msra.mxu0 0.0
    %82 = vmatprep.subr.mxu0 0.0
    %83 = vmatpush2.msra.mxu0 0.0
    %84 = vmatprep.subr.mxu0 0.0
    %85 = vmatpush2.msra.mxu0 0.0
    %86 = vmatprep.subr.mxu0 0.0
    %87 = vmatpush2.msra.mxu0 0.0
    %88 = vmatprep.subr.mxu0 0.0
    %89 = vmatpush2.msra.mxu0 0.0
    %90 = vmatprep.subr.mxu0 0.0
    %91 = vmatpush2.msra.mxu0 0.0
    %92 = vmatprep.subr.mxu0 0.0
    %93 = vmatpush2.msra.mxu0 0.0
    %94 = vmatprep.subr.mxu0 0.0
    %95 = vmatpush2.msra.mxu0 0.0
    %96 = vmatprep.subr.mxu0 0.0
    %97 = vmatpush2.msra.mxu0 0.0
    %98 = vmatprep.subr.mxu0 0.0
    %99 = vmatpush2.msra.mxu0 0.0
    %100 = vmatprep.subr.mxu0 0.0
    %101 = vmatpush2.msra.mxu0 0.0
    %102 = vmatprep.subr.mxu0 0.0
    %103 = vmatpush2.msra.mxu0 0.0
    %104 = vmatprep.subr.mxu0 0.0
    %105 = vmatpush2.msra.mxu0 0.0
    %106 = vmatprep.subr.mxu0 0.0
    %107 = vmatpush2.msra.mxu0 0.0
    %108 = vmatprep.subr.mxu0 0.0
    %109 = vmatpush2.msra.mxu0 0.0
    %110 = vmatprep.subr.mxu0 0.0
    %111 = vmatpush2.msra.mxu0 0.0
    %112 = vmatprep.mubr.f32.mxu0 0.0
    %113 = vmatmul.mubr.f32.gmra.mxu0 %v42
    %v114 = vpop.f32.mrf.mxu0
    %v115 = vadd.f32 %v39, %v114
    %v116 = vpop.f32.mrf.mxu0
    %117 = vdwg.mxu0
    %v118 = vmax.f32 %v115, 0.0
    %v119 = vld [vmem:[%s5] sm:$0xff]
    %v120 = vld [vmem:[%s5 + $0x8] sm:$0xff]
    %v121 = vld [vmem:[%s5 + $0x10] sm:$0xff]
    %v122 = vld [vmem:[%s5 + $0x18] sm:$0xff]
    %v123 = vld [vmem:[%s6] sm:$0x1]
    %v125 = vlaneseq
    %v126 = vshrl.u32 %v125, 7
    %v127 = vsub.s32 0, %v126
    %v128 = vrot.slane %v123, %v127
    %vm130 = vcmask 261120
    %v132 = vsel %vm130, %v118, 0
    %134 = vmatprep.subr.mxu0 0.0
    %135 = vmatpush1.msra.mxu0 0.0
    %136 = vmatprep.subr.mxu0 0.0
    %137 = vmatpush1.msra.mxu0 0.0
    %138 = vmatprep.subr.mxu0 0.0
    %139 = vmatpush1.msra.mxu0 0.0
    %140 = vmatprep.subr.mxu0 0.0
    %141 = vmatpush1.msra.mxu0 0.0
    %142 = vmatprep.subr.mxu0 0.0
    %143 = vmatpush1.msra.mxu0 0.0
    %144 = vmatprep.subr.mxu0 0.0
    %145 = vmatpush1.msra.mxu0 0.0
    %146 = vmatprep.subr.mxu0 0.0
    %147 = vmatpush1.msra.mxu0 0.0
    %148 = vmatprep.subr.mxu0 0.0
    %149 = vmatpush1.msra.mxu0 0.0
    %150 = vmatprep.subr.mxu0 0.0
    %151 = vmatpush1.msra.mxu0 0.0
    %152 = vmatprep.subr.mxu0 0.0
    %153 = vmatpush1.msra.mxu0 0.0
    %154 = vmatprep.subr.mxu0 0.0
    %155 = vmatpush1.msra.mxu0 0.0
    %156 = vmatprep.subr.mxu0 0.0
    %157 = vmatpush1.msra.mxu0 0.0
    %158 = vmatprep.subr.mxu0 0.0
    %159 = vmatpush1.msra.mxu0 %v122
    %160 = vmatprep.subr.mxu0 0.0
    %161 = vmatpush1.msra.mxu0 %v121
    %162 = vmatprep.subr.mxu0 0.0
    %163 = vmatpush1.msra.mxu0 %v120
    %164 = vmatprep.subr.mxu0 0.0
    %165 = vmatpush1.msra.mxu0 %v119
    %166 = vmatprep.subr.mxu0 0.0
    %167 = vmatpush2.msra.mxu0 0.0
    %168 = vmatprep.subr.mxu0 0.0
    %169 = vmatpush2.msra.mxu0 0.0
    %170 = vmatprep.subr.mxu0 0.0
    %171 = vmatpush2.msra.mxu0 0.0
    %172 = vmatprep.subr.mxu0 0.0
    %173 = vmatpush2.msra.mxu0 0.0
    %174 = vmatprep.subr.mxu0 0.0
    %175 = vmatpush2.msra.mxu0 0.0
    %176 = vmatprep.subr.mxu0 0.0
    %177 = vmatpush2.msra.mxu0 0.0
    %178 = vmatprep.subr.mxu0 0.0
    %179 = vmatpush2.msra.mxu0 0.0
    %180 = vmatprep.subr.mxu0 0.0
    %181 = vmatpush2.msra.mxu0 0.0
    %182 = vmatprep.subr.mxu0 0.0
    %183 = vmatpush2.msra.mxu0 0.0
    %184 = vmatprep.subr.mxu0 0.0
    %185 = vmatpush2.msra.mxu0 0.0
    %186 = vmatprep.subr.mxu0 0.0
    %187 = vmatpush2.msra.mxu0 0.0
    %188 = vmatprep.subr.mxu0 0.0
    %189 = vmatpush2.msra.mxu0 0.0
    %190 = vmatprep.subr.mxu0 0.0
    %191 = vmatpush2.msra.mxu0 0.0
    %192 = vmatprep.subr.mxu0 0.0
    %193 = vmatpush2.msra.mxu0 0.0
    %194 = vmatprep.subr.mxu0 0.0
    %195 = vmatpush2.msra.mxu0 0.0
    %196 = vmatprep.subr.mxu0 0.0
    %197 = vmatpush2.msra.mxu0 0.0
    %198 = vmatprep.mubr.f32.mxu0 0.0
    %199 = vmatmul.mubr.f32.gmra.mxu0 %v132
    %v200 = vpop.f32.mrf.mxu0
    %v201 = vadd.f32 %v128, %v200
    %v202 = vpop.f32.mrf.mxu0
    %203 = vdwg.mxu0
    %v204 = vmax.f32 %v201, 0.0
    %v205 = vld [vmem:[%s7] sm:$0xff]
    %v206 = vld [vmem:[%s7 + $0x8] sm:$0xff]
    %v207 = vld [vmem:[%s7 + $0x10] sm:$0xff]
    %v208 = vld [vmem:[%s7 + $0x18] sm:$0xff]
    %v209 = vld [vmem:[%s8] sm:$0x1]
    %v211 = vlaneseq
    %v212 = vshrl.u32 %v211, 7
    %v213 = vsub.s32 0, %v212
    %v214 = vrot.slane %v209, %v213
    %v217 = vsel %vm130, %v204, 0
    %219 = vmatprep.subr.mxu0 0.0
    %220 = vmatpush1.msra.mxu0 0.0
    %221 = vmatprep.subr.mxu0 0.0
    %222 = vmatpush1.msra.mxu0 0.0
    %223 = vmatprep.subr.mxu0 0.0
    %224 = vmatpush1.msra.mxu0 0.0
    %225 = vmatprep.subr.mxu0 0.0
    %226 = vmatpush1.msra.mxu0 0.0
    %227 = vmatprep.subr.mxu0 0.0
    %228 = vmatpush1.msra.mxu0 0.0
    %229 = vmatprep.subr.mxu0 0.0
    %230 = vmatpush1.msra.mxu0 0.0
    %231 = vmatprep.subr.mxu0 0.0
    %232 = vmatpush1.msra.mxu0 0.0
    %233 = vmatprep.subr.mxu0 0.0
    %234 = vmatpush1.msra.mxu0 0.0
    %235 = vmatprep.subr.mxu0 0.0
    %236 = vmatpush1.msra.mxu0 0.0
    %237 = vmatprep.subr.mxu0 0.0
    %238 = vmatpush1.msra.mxu0 0.0
    %239 = vmatprep.subr.mxu0 0.0
    %240 = vmatpush1.msra.mxu0 0.0
    %241 = vmatprep.subr.mxu0 0.0
    %242 = vmatpush1.msra.mxu0 0.0
    %243 = vmatprep.subr.mxu0 0.0
    %244 = vmatpush1.msra.mxu0 %v208
    %245 = vmatprep.subr.mxu0 0.0
    %246 = vmatpush1.msra.mxu0 %v207
    %247 = vmatprep.subr.mxu0 0.0
    %248 = vmatpush1.msra.mxu0 %v206
    %249 = vmatprep.subr.mxu0 0.0
    %250 = vmatpush1.msra.mxu0 %v205
    %251 = vmatprep.subr.mxu0 0.0
    %252 = vmatpush2.msra.mxu0 0.0
    %253 = vmatprep.subr.mxu0 0.0
    %254 = vmatpush2.msra.mxu0 0.0
    %255 = vmatprep.subr.mxu0 0.0
    %256 = vmatpush2.msra.mxu0 0.0
    %257 = vmatprep.subr.mxu0 0.0
    %258 = vmatpush2.msra.mxu0 0.0
    %259 = vmatprep.subr.mxu0 0.0
    %260 = vmatpush2.msra.mxu0 0.0
    %261 = vmatprep.subr.mxu0 0.0
    %262 = vmatpush2.msra.mxu0 0.0
    %263 = vmatprep.subr.mxu0 0.0
    %264 = vmatpush2.msra.mxu0 0.0
    %265 = vmatprep.subr.mxu0 0.0
    %266 = vmatpush2.msra.mxu0 0.0
    %267 = vmatprep.subr.mxu0 0.0
    %268 = vmatpush2.msra.mxu0 0.0
    %269 = vmatprep.subr.mxu0 0.0
    %270 = vmatpush2.msra.mxu0 0.0
    %271 = vmatprep.subr.mxu0 0.0
    %272 = vmatpush2.msra.mxu0 0.0
    %273 = vmatprep.subr.mxu0 0.0
    %274 = vmatpush2.msra.mxu0 0.0
    %275 = vmatprep.subr.mxu0 0.0
    %276 = vmatpush2.msra.mxu0 0.0
    %277 = vmatprep.subr.mxu0 0.0
    %278 = vmatpush2.msra.mxu0 0.0
    %279 = vmatprep.subr.mxu0 0.0
    %280 = vmatpush2.msra.mxu0 0.0
    %281 = vmatprep.subr.mxu0 0.0
    %282 = vmatpush2.msra.mxu0 0.0
    %283 = vmatprep.mubr.f32.mxu0 0.0
    %284 = vmatmul.mubr.f32.gmra.mxu0 %v217
    %v285 = vpop.f32.mrf.mxu0
    %v286 = vadd.f32 %v214, %v285
    %v287 = vpop.f32.mrf.mxu0
    %288 = vdwg.mxu0
    %v289 = vld [vmem:[%s3] sm:$0x3]
    %v290 = vsub.f32 %v286, %v289
    %s291 = sld [smem:[#allocation3]]
    %v292 = vmul.f32 %v290, %v290
    %v293 = vstv %s291
    %v294 = vmul.f32 %v293, %v292
    %v295 = vadd.f32 %v294, 0.0
    %s296 = scalar_lea.vmem %s2, 2
    %v297 = vld [vmem:[%s296] sm:$0x3]
    %v299 = vsel %vm40, %v286, 0
    %301 = vmatprep.subr.mxu0 0.0
    %302 = vmatpush1.msra.mxu0 0.0
    %303 = vmatprep.subr.mxu0 0.0
    %304 = vmatpush1.msra.mxu0 0.0
    %305 = vmatprep.subr.mxu0 0.0
    %306 = vmatpush1.msra.mxu0 0.0
    %307 = vmatprep.subr.mxu0 0.0
    %308 = vmatpush1.msra.mxu0 0.0
    %309 = vmatprep.subr.mxu0 0.0
    %310 = vmatpush1.msra.mxu0 0.0
    %311 = vmatprep.subr.mxu0 0.0
    %312 = vmatpush1.msra.mxu0 0.0
    %313 = vmatprep.subr.mxu0 0.0
    %314 = vmatpush1.msra.mxu0 0.0
    %315 = vmatprep.subr.mxu0 0.0
    %316 = vmatpush1.msra.mxu0 0.0
    %317 = vmatprep.subr.mxu0 0.0
    %318 = vmatpush1.msra.mxu0 0.0
    %319 = vmatprep.subr.mxu0 0.0
    %320 = vmatpush1.msra.mxu0 0.0
    %321 = vmatprep.subr.mxu0 0.0
    %322 = vmatpush1.msra.mxu0 0.0
    %323 = vmatprep.subr.mxu0 0.0
    %324 = vmatpush1.msra.mxu0 0.0
    %325 = vmatprep.subr.mxu0 0.0
    %326 = vmatpush1.msra.mxu0 0.0
    %327 = vmatprep.subr.mxu0 0.0
    %328 = vmatpush1.msra.mxu0 0.0
    %329 = vmatprep.subr.mxu0 0.0
    %330 = vmatpush1.msra.mxu0 0.0
    %331 = vmatprep.subr.mxu0 0.0
    %332 = vmatpush1.msra.mxu0 %v46
    %333 = vmatprep.subr.mxu0 0.0
    %334 = vmatpush2.msra.mxu0 0.0
    %335 = vmatprep.subr.mxu0 0.0
    %336 = vmatpush2.msra.mxu0 0.0
    %337 = vmatprep.subr.mxu0 0.0
    %338 = vmatpush2.msra.mxu0 0.0
    %339 = vmatprep.subr.mxu0 0.0
    %340 = vmatpush2.msra.mxu0 0.0
    %341 = vmatprep.subr.mxu0 0.0
    %342 = vmatpush2.msra.mxu0 0.0
    %343 = vmatprep.subr.mxu0 0.0
    %344 = vmatpush2.msra.mxu0 0.0
    %345 = vmatprep.subr.mxu0 0.0
    %346 = vmatpush2.msra.mxu0 0.0
    %347 = vmatprep.subr.mxu0 0.0
    %348 = vmatpush2.msra.mxu0 0.0
    %349 = vmatprep.subr.mxu0 0.0
    %350 = vmatpush2.msra.mxu0 0.0
    %351 = vmatprep.subr.mxu0 0.0
    %352 = vmatpush2.msra.mxu0 0.0
    %353 = vmatprep.subr.mxu0 0.0
    %354 = vmatpush2.msra.mxu0 0.0
    %355 = vmatprep.subr.mxu0 0.0
    %356 = vmatpush2.msra.mxu0 0.0
    %357 = vmatprep.subr.mxu0 0.0
    %358 = vmatpush2.msra.mxu0 0.0
    %359 = vmatprep.subr.mxu0 0.0
    %360 = vmatpush2.msra.mxu0 0.0
    %361 = vmatprep.subr.mxu0 0.0
    %362 = vmatpush2.msra.mxu0 0.0
    %363 = vmatprep.subr.mxu0 0.0
    %364 = vmatpush2.msra.mxu0 0.0
    %365 = vmatprep.mubr.f32.mxu0 0.0
    %366 = vmatmul.mubr.f32.gmra.mxu0 %v299
    %v367 = vpop.f32.mrf.mxu0
    %v368 = vadd.f32 %v297, %v367
    %v369 = vpop.f32.mrf.mxu0
    %370 = vdwg.mxu0
    %v371 = vmax.f32 %v368, 0.0
    %v373 = vsel %vm130, %v371, 0
    %375 = vmatprep.subr.mxu0 0.0
    %376 = vmatpush1.msra.mxu0 0.0
    %377 = vmatprep.subr.mxu0 0.0
    %378 = vmatpush1.msra.mxu0 0.0
    %379 = vmatprep.subr.mxu0 0.0
    %380 = vmatpush1.msra.mxu0 0.0
    %381 = vmatprep.subr.mxu0 0.0
    %382 = vmatpush1.msra.mxu0 0.0
    %383 = vmatprep.subr.mxu0 0.0
    %384 = vmatpush1.msra.mxu0 0.0
    %385 = vmatprep.subr.mxu0 0.0
    %386 = vmatpush1.msra.mxu0 0.0
    %387 = vmatprep.subr.mxu0 0.0
    %388 = vmatpush1.msra.mxu0 0.0
    %389 = vmatprep.subr.mxu0 0.0
    %390 = vmatpush1.msra.mxu0 0.0
    %391 = vmatprep.subr.mxu0 0.0
    %392 = vmatpush1.msra.mxu0 0.0
    %393 = vmatprep.subr.mxu0 0.0
    %394 = vmatpush1.msra.mxu0 0.0
    %395 = vmatprep.subr.mxu0 0.0
    %396 = vmatpush1.msra.mxu0 0.0
    %397 = vmatprep.subr.mxu0 0.0
    %398 = vmatpush1.msra.mxu0 0.0
    %399 = vmatprep.subr.mxu0 0.0
    %400 = vmatpush1.msra.mxu0 %v122
    %401 = vmatprep.subr.mxu0 0.0
    %402 = vmatpush1.msra.mxu0 %v121
    %403 = vmatprep.subr.mxu0 0.0
    %404 = vmatpush1.msra.mxu0 %v120
    %405 = vmatprep.subr.mxu0 0.0
    %406 = vmatpush1.msra.mxu0 %v119
    %407 = vmatprep.subr.mxu0 0.0
    %408 = vmatpush2.msra.mxu0 0.0
    %409 = vmatprep.subr.mxu0 0.0
    %410 = vmatpush2.msra.mxu0 0.0
    %411 = vmatprep.subr.mxu0 0.0
    %412 = vmatpush2.msra.mxu0 0.0
    %413 = vmatprep.subr.mxu0 0.0
    %414 = vmatpush2.msra.mxu0 0.0
    %415 = vmatprep.subr.mxu0 0.0
    %416 = vmatpush2.msra.mxu0 0.0
    %417 = vmatprep.subr.mxu0 0.0
    %418 = vmatpush2.msra.mxu0 0.0
    %419 = vmatprep.subr.mxu0 0.0
    %420 = vmatpush2.msra.mxu0 0.0
    %421 = vmatprep.subr.mxu0 0.0
    %422 = vmatpush2.msra.mxu0 0.0
    %423 = vmatprep.subr.mxu0 0.0
    %424 = vmatpush2.msra.mxu0 0.0
    %425 = vmatprep.subr.mxu0 0.0
    %426 = vmatpush2.msra.mxu0 0.0
    %427 = vmatprep.subr.mxu0 0.0
    %428 = vmatpush2.msra.mxu0 0.0
    %429 = vmatprep.subr.mxu0 0.0
    %430 = vmatpush2.msra.mxu0 0.0
    %431 = vmatprep.subr.mxu0 0.0
    %432 = vmatpush2.msra.mxu0 0.0
    %433 = vmatprep.subr.mxu0 0.0
    %434 = vmatpush2.msra.mxu0 0.0
    %435 = vmatprep.subr.mxu0 0.0
    %436 = vmatpush2.msra.mxu0 0.0
    %437 = vmatprep.subr.mxu0 0.0
    %438 = vmatpush2.msra.mxu0 0.0
    %439 = vmatprep.mubr.f32.mxu0 0.0
    %440 = vmatmul.mubr.f32.gmra.mxu0 %v373
    %v441 = vpop.f32.mrf.mxu0
    %v442 = vadd.f32 %v128, %v441
    %v443 = vpop.f32.mrf.mxu0
    %444 = vdwg.mxu0
    %v445 = vmax.f32 %v442, 0.0
    %v447 = vsel %vm130, %v445, 0
    %449 = vmatprep.subr.mxu0 0.0
    %450 = vmatpush1.msra.mxu0 0.0
    %451 = vmatprep.subr.mxu0 0.0
    %452 = vmatpush1.msra.mxu0 0.0
    %453 = vmatprep.subr.mxu0 0.0
    %454 = vmatpush1.msra.mxu0 0.0
    %455 = vmatprep.subr.mxu0 0.0
    %456 = vmatpush1.msra.mxu0 0.0
    %457 = vmatprep.subr.mxu0 0.0
    %458 = vmatpush1.msra.mxu0 0.0
    %459 = vmatprep.subr.mxu0 0.0
    %460 = vmatpush1.msra.mxu0 0.0
    %461 = vmatprep.subr.mxu0 0.0
    %462 = vmatpush1.msra.mxu0 0.0
    %463 = vmatprep.subr.mxu0 0.0
    %464 = vmatpush1.msra.mxu0 0.0
    %465 = vmatprep.subr.mxu0 0.0
    %466 = vmatpush1.msra.mxu0 0.0
    %467 = vmatprep.subr.mxu0 0.0
    %468 = vmatpush1.msra.mxu0 0.0
    %469 = vmatprep.subr.mxu0 0.0
    %470 = vmatpush1.msra.mxu0 0.0
    %471 = vmatprep.subr.mxu0 0.0
    %472 = vmatpush1.msra.mxu0 0.0
    %473 = vmatprep.subr.mxu0 0.0
    %474 = vmatpush1.msra.mxu0 %v208
    %475 = vmatprep.subr.mxu0 0.0
    %476 = vmatpush1.msra.mxu0 %v207
    %477 = vmatprep.subr.mxu0 0.0
    %478 = vmatpush1.msra.mxu0 %v206
    %479 = vmatprep.subr.mxu0 0.0
    %480 = vmatpush1.msra.mxu0 %v205
    %481 = vmatprep.subr.mxu0 0.0
    %482 = vmatpush2.msra.mxu0 0.0
    %483 = vmatprep.subr.mxu0 0.0
    %484 = vmatpush2.msra.mxu0 0.0
    %485 = vmatprep.subr.mxu0 0.0
    %486 = vmatpush2.msra.mxu0 0.0
    %487 = vmatprep.subr.mxu0 0.0
    %488 = vmatpush2.msra.mxu0 0.0
    %489 = vmatprep.subr.mxu0 0.0
    %490 = vmatpush2.msra.mxu0 0.0
    %491 = vmatprep.subr.mxu0 0.0
    %492 = vmatpush2.msra.mxu0 0.0
    %493 = vmatprep.subr.mxu0 0.0
    %494 = vmatpush2.msra.mxu0 0.0
    %495 = vmatprep.subr.mxu0 0.0
    %496 = vmatpush2.msra.mxu0 0.0
    %497 = vmatprep.subr.mxu0 0.0
    %498 = vmatpush2.msra.mxu0 0.0
    %499 = vmatprep.subr.mxu0 0.0
    %500 = vmatpush2.msra.mxu0 0.0
    %501 = vmatprep.subr.mxu0 0.0
    %502 = vmatpush2.msra.mxu0 0.0
    %503 = vmatprep.subr.mxu0 0.0
    %504 = vmatpush2.msra.mxu0 0.0
    %505 = vmatprep.subr.mxu0 0.0
    %506 = vmatpush2.msra.mxu0 0.0
    %507 = vmatprep.subr.mxu0 0.0
    %508 = vmatpush2.msra.mxu0 0.0
    %509 = vmatprep.subr.mxu0 0.0
    %510 = vmatpush2.msra.mxu0 0.0
    %511 = vmatprep.subr.mxu0 0.0
    %512 = vmatpush2.msra.mxu0 0.0
    %513 = vmatprep.mubr.f32.mxu0 0.0
    %514 = vmatmul.mubr.f32.gmra.mxu0 %v447
    %v515 = vpop.f32.mrf.mxu0
    %v516 = vadd.f32 %v214, %v515
    %v517 = vpop.f32.mrf.mxu0
    %518 = vdwg.mxu0
    %s519 = scalar_lea.vmem %s3, 2
    %v520 = vld [vmem:[%s519] sm:$0x3]
    %v521 = vsub.f32 %v516, %v520
    %s522 = sld [smem:[#allocation3 + $0x1]]
    %v523 = vmul.f32 %v521, %v521
    %v524 = vstv %s522
    %v525 = vmul.f32 %v524, %v523
    %v526 = vadd.f32 %v295, %v525
    %s527 = scalar_lea.vmem %s2, 4
    %v528 = vld [vmem:[%s527] sm:$0x3]
    %v530 = vsel %vm40, %v516, 0
    %532 = vmatprep.subr.mxu0 0.0
    %533 = vmatpush1.msra.mxu0 0.0
    %534 = vmatprep.subr.mxu0 0.0
    %535 = vmatpush1.msra.mxu0 0.0
    %536 = vmatprep.subr.mxu0 0.0
    %537 = vmatpush1.msra.mxu0 0.0
    %538 = vmatprep.subr.mxu0 0.0
    %539 = vmatpush1.msra.mxu0 0.0
    %540 = vmatprep.subr.mxu0 0.0
    %541 = vmatpush1.msra.mxu0 0.0
    %542 = vmatprep.subr.mxu0 0.0
    %543 = vmatpush1.msra.mxu0 0.0
    %544 = vmatprep.subr.mxu0 0.0
    %545 = vmatpush1.msra.mxu0 0.0
    %546 = vmatprep.subr.mxu0 0.0
    %547 = vmatpush1.msra.mxu0 0.0
    %548 = vmatprep.subr.mxu0 0.0
    %549 = vmatpush1.msra.mxu0 0.0
    %550 = vmatprep.subr.mxu0 0.0
    %551 = vmatpush1.msra.mxu0 0.0
    %552 = vmatprep.subr.mxu0 0.0
    %553 = vmatpush1.msra.mxu0 0.0
    %554 = vmatprep.subr.mxu0 0.0
    %555 = vmatpush1.msra.mxu0 0.0
    %556 = vmatprep.subr.mxu0 0.0
    %557 = vmatpush1.msra.mxu0 0.0
    %558 = vmatprep.subr.mxu0 0.0
    %559 = vmatpush1.msra.mxu0 0.0
    %560 = vmatprep.subr.mxu0 0.0
    %561 = vmatpush1.msra.mxu0 0.0
    %562 = vmatprep.subr.mxu0 0.0
    %563 = vmatpush1.msra.mxu0 %v46
    %564 = vmatprep.subr.mxu0 0.0
    %565 = vmatpush2.msra.mxu0 0.0
    %566 = vmatprep.subr.mxu0 0.0
    %567 = vmatpush2.msra.mxu0 0.0
    %568 = vmatprep.subr.mxu0 0.0
    %569 = vmatpush2.msra.mxu0 0.0
    %570 = vmatprep.subr.mxu0 0.0
    %571 = vmatpush2.msra.mxu0 0.0
    %572 = vmatprep.subr.mxu0 0.0
    %573 = vmatpush2.msra.mxu0 0.0
    %574 = vmatprep.subr.mxu0 0.0
    %575 = vmatpush2.msra.mxu0 0.0
    %576 = vmatprep.subr.mxu0 0.0
    %577 = vmatpush2.msra.mxu0 0.0
    %578 = vmatprep.subr.mxu0 0.0
    %579 = vmatpush2.msra.mxu0 0.0
    %580 = vmatprep.subr.mxu0 0.0
    %581 = vmatpush2.msra.mxu0 0.0
    %582 = vmatprep.subr.mxu0 0.0
    %583 = vmatpush2.msra.mxu0 0.0
    %584 = vmatprep.subr.mxu0 0.0
    %585 = vmatpush2.msra.mxu0 0.0
    %586 = vmatprep.subr.mxu0 0.0
    %587 = vmatpush2.msra.mxu0 0.0
    %588 = vmatprep.subr.mxu0 0.0
    %589 = vmatpush2.msra.mxu0 0.0
    %590 = vmatprep.subr.mxu0 0.0
    %591 = vmatpush2.msra.mxu0 0.0
    %592 = vmatprep.subr.mxu0 0.0
    %593 = vmatpush2.msra.mxu0 0.0
    %594 = vmatprep.subr.mxu0 0.0
    %595 = vmatpush2.msra.mxu0 0.0
    %596 = vmatprep.mubr.f32.mxu0 0.0
    %597 = vmatmul.mubr.f32.gmra.mxu0 %v530
    %v598 = vpop.f32.mrf.mxu0
    %v599 = vadd.f32 %v528, %v598
    %v600 = vpop.f32.mrf.mxu0
    %601 = vdwg.mxu0
    %v602 = vmax.f32 %v599, 0.0
    %v604 = vsel %vm130, %v602, 0
    %606 = vmatprep.subr.mxu0 0.0
    %607 = vmatpush1.msra.mxu0 0.0
    %608 = vmatprep.subr.mxu0 0.0
    %609 = vmatpush1.msra.mxu0 0.0
    %610 = vmatprep.subr.mxu0 0.0
    %611 = vmatpush1.msra.mxu0 0.0
    %612 = vmatprep.subr.mxu0 0.0
    %613 = vmatpush1.msra.mxu0 0.0
    %614 = vmatprep.subr.mxu0 0.0
    %615 = vmatpush1.msra.mxu0 0.0
    %616 = vmatprep.subr.mxu0 0.0
    %617 = vmatpush1.msra.mxu0 0.0
    %618 = vmatprep.subr.mxu0 0.0
    %619 = vmatpush1.msra.mxu0 0.0
    %620 = vmatprep.subr.mxu0 0.0
    %621 = vmatpush1.msra.mxu0 0.0
    %622 = vmatprep.subr.mxu0 0.0
    %623 = vmatpush1.msra.mxu0 0.0
    %624 = vmatprep.subr.mxu0 0.0
    %625 = vmatpush1.msra.mxu0 0.0
    %626 = vmatprep.subr.mxu0 0.0
    %627 = vmatpush1.msra.mxu0 0.0
    %628 = vmatprep.subr.mxu0 0.0
    %629 = vmatpush1.msra.mxu0 0.0
    %630 = vmatprep.subr.mxu0 0.0
    %631 = vmatpush1.msra.mxu0 %v122
    %632 = vmatprep.subr.mxu0 0.0
    %633 = vmatpush1.msra.mxu0 %v121
    %634 = vmatprep.subr.mxu0 0.0
    %635 = vmatpush1.msra.mxu0 %v120
    %636 = vmatprep.subr.mxu0 0.0
    %637 = vmatpush1.msra.mxu0 %v119
    %638 = vmatprep.subr.mxu0 0.0
    %639 = vmatpush2.msra.mxu0 0.0
    %640 = vmatprep.subr.mxu0 0.0
    %641 = vmatpush2.msra.mxu0 0.0
    %642 = vmatprep.subr.mxu0 0.0
    %643 = vmatpush2.msra.mxu0 0.0
    %644 = vmatprep.subr.mxu0 0.0
    %645 = vmatpush2.msra.mxu0 0.0
    %646 = vmatprep.subr.mxu0 0.0
    %647 = vmatpush2.msra.mxu0 0.0
    %648 = vmatprep.subr.mxu0 0.0
    %649 = vmatpush2.msra.mxu0 0.0
    %650 = vmatprep.subr.mxu0 0.0
    %651 = vmatpush2.msra.mxu0 0.0
    %652 = vmatprep.subr.mxu0 0.0
    %653 = vmatpush2.msra.mxu0 0.0
    %654 = vmatprep.subr.mxu0 0.0
    %655 = vmatpush2.msra.mxu0 0.0
    %656 = vmatprep.subr.mxu0 0.0
    %657 = vmatpush2.msra.mxu0 0.0
    %658 = vmatprep.subr.mxu0 0.0
    %659 = vmatpush2.msra.mxu0 0.0
    %660 = vmatprep.subr.mxu0 0.0
    %661 = vmatpush2.msra.mxu0 0.0
    %662 = vmatprep.subr.mxu0 0.0
    %663 = vmatpush2.msra.mxu0 0.0
    %664 = vmatprep.subr.mxu0 0.0
    %665 = vmatpush2.msra.mxu0 0.0
    %666 = vmatprep.subr.mxu0 0.0
    %667 = vmatpush2.msra.mxu0 0.0
    %668 = vmatprep.subr.mxu0 0.0
    %669 = vmatpush2.msra.mxu0 0.0
    %670 = vmatprep.mubr.f32.mxu0 0.0
    %671 = vmatmul.mubr.f32.gmra.mxu0 %v604
    %v672 = vpop.f32.mrf.mxu0
    %v673 = vadd.f32 %v128, %v672
    %v674 = vpop.f32.mrf.mxu0
    %675 = vdwg.mxu0
    %v676 = vmax.f32 %v673, 0.0
    %v678 = vsel %vm130, %v676, 0
    %680 = vmatprep.subr.mxu0 0.0
    %681 = vmatpush1.msra.mxu0 0.0
    %682 = vmatprep.subr.mxu0 0.0
    %683 = vmatpush1.msra.mxu0 0.0
    %684 = vmatprep.subr.mxu0 0.0
    %685 = vmatpush1.msra.mxu0 0.0
    %686 = vmatprep.subr.mxu0 0.0
    %687 = vmatpush1.msra.mxu0 0.0
    %688 = vmatprep.subr.mxu0 0.0
    %689 = vmatpush1.msra.mxu0 0.0
    %690 = vmatprep.subr.mxu0 0.0
    %691 = vmatpush1.msra.mxu0 0.0
    %692 = vmatprep.subr.mxu0 0.0
    %693 = vmatpush1.msra.mxu0 0.0
    %694 = vmatprep.subr.mxu0 0.0
    %695 = vmatpush1.msra.mxu0 0.0
    %696 = vmatprep.subr.mxu0 0.0
    %697 = vmatpush1.msra.mxu0 0.0
    %698 = vmatprep.subr.mxu0 0.0
    %699 = vmatpush1.msra.mxu0 0.0
    %700 = vmatprep.subr.mxu0 0.0
    %701 = vmatpush1.msra.mxu0 0.0
    %702 = vmatprep.subr.mxu0 0.0
    %703 = vmatpush1.msra.mxu0 0.0
    %704 = vmatprep.subr.mxu0 0.0
    %705 = vmatpush1.msra.mxu0 %v208
    %706 = vmatprep.subr.mxu0 0.0
    %707 = vmatpush1.msra.mxu0 %v207
    %708 = vmatprep.subr.mxu0 0.0
    %709 = vmatpush1.msra.mxu0 %v206
    %710 = vmatprep.subr.mxu0 0.0
    %711 = vmatpush1.msra.mxu0 %v205
    %712 = vmatprep.subr.mxu0 0.0
    %713 = vmatpush2.msra.mxu0 0.0
    %714 = vmatprep.subr.mxu0 0.0
    %715 = vmatpush2.msra.mxu0 0.0
    %716 = vmatprep.subr.mxu0 0.0
    %717 = vmatpush2.msra.mxu0 0.0
    %718 = vmatprep.subr.mxu0 0.0
    %719 = vmatpush2.msra.mxu0 0.0
    %720 = vmatprep.subr.mxu0 0.0
    %721 = vmatpush2.msra.mxu0 0.0
    %722 = vmatprep.subr.mxu0 0.0
    %723 = vmatpush2.msra.mxu0 0.0
    %724 = vmatprep.subr.mxu0 0.0
    %725 = vmatpush2.msra.mxu0 0.0
    %726 = vmatprep.subr.mxu0 0.0
    %727 = vmatpush2.msra.mxu0 0.0
    %728 = vmatprep.subr.mxu0 0.0
    %729 = vmatpush2.msra.mxu0 0.0
    %730 = vmatprep.subr.mxu0 0.0
    %731 = vmatpush2.msra.mxu0 0.0
    %732 = vmatprep.subr.mxu0 0.0
    %733 = vmatpush2.msra.mxu0 0.0
    %734 = vmatprep.subr.mxu0 0.0
    %735 = vmatpush2.msra.mxu0 0.0
    %736 = vmatprep.subr.mxu0 0.0
    %737 = vmatpush2.msra.mxu0 0.0
    %738 = vmatprep.subr.mxu0 0.0
    %739 = vmatpush2.msra.mxu0 0.0
    %740 = vmatprep.subr.mxu0 0.0
    %741 = vmatpush2.msra.mxu0 0.0
    %742 = vmatprep.subr.mxu0 0.0
    %743 = vmatpush2.msra.mxu0 0.0
    %744 = vmatprep.mubr.f32.mxu0 0.0
    %745 = vmatmul.mubr.f32.gmra.mxu0 %v678
    %v746 = vpop.f32.mrf.mxu0
    %v747 = vadd.f32 %v214, %v746
    %v748 = vpop.f32.mrf.mxu0
    %749 = vdwg.mxu0
    %s750 = scalar_lea.vmem %s3, 4
    %v751 = vld [vmem:[%s750] sm:$0x3]
    %v752 = vsub.f32 %v747, %v751
    %s753 = sld [smem:[#allocation3 + $0x2]]
    %v754 = vmul.f32 %v752, %v752
    %v755 = vstv %s753
    %v756 = vmul.f32 %v755, %v754
    %v757 = vadd.f32 %v526, %v756
    %s758 = scalar_lea.vmem %s2, 6
    %v759 = vld [vmem:[%s758] sm:$0x3]
    %v761 = vsel %vm40, %v747, 0
    %763 = vmatprep.subr.mxu0 0.0
    %764 = vmatpush1.msra.mxu0 0.0
    %765 = vmatprep.subr.mxu0 0.0
    %766 = vmatpush1.msra.mxu0 0.0
    %767 = vmatprep.subr.mxu0 0.0
    %768 = vmatpush1.msra.mxu0 0.0
    %769 = vmatprep.subr.mxu0 0.0
    %770 = vmatpush1.msra.mxu0 0.0
    %771 = vmatprep.subr.mxu0 0.0
    %772 = vmatpush1.msra.mxu0 0.0
    %773 = vmatprep.subr.mxu0 0.0
    %774 = vmatpush1.msra.mxu0 0.0
    %775 = vmatprep.subr.mxu0 0.0
    %776 = vmatpush1.msra.mxu0 0.0
    %777 = vmatprep.subr.mxu0 0.0
    %778 = vmatpush1.msra.mxu0 0.0
    %779 = vmatprep.subr.mxu0 0.0
    %780 = vmatpush1.msra.mxu0 0.0
    %781 = vmatprep.subr.mxu0 0.0
    %782 = vmatpush1.msra.mxu0 0.0
    %783 = vmatprep.subr.mxu0 0.0
    %784 = vmatpush1.msra.mxu0 0.0
    %785 = vmatprep.subr.mxu0 0.0
    %786 = vmatpush1.msra.mxu0 0.0
    %787 = vmatprep.subr.mxu0 0.0
    %788 = vmatpush1.msra.mxu0 0.0
    %789 = vmatprep.subr.mxu0 0.0
    %790 = vmatpush1.msra.mxu0 0.0
    %791 = vmatprep.subr.mxu0 0.0
    %792 = vmatpush1.msra.mxu0 0.0
    %793 = vmatprep.subr.mxu0 0.0
    %794 = vmatpush1.msra.mxu0 %v46
    %795 = vmatprep.subr.mxu0 0.0
    %796 = vmatpush2.msra.mxu0 0.0
    %797 = vmatprep.subr.mxu0 0.0
    %798 = vmatpush2.msra.mxu0 0.0
    %799 = vmatprep.subr.mxu0 0.0
    %800 = vmatpush2.msra.mxu0 0.0
    %801 = vmatprep.subr.mxu0 0.0
    %802 = vmatpush2.msra.mxu0 0.0
    %803 = vmatprep.subr.mxu0 0.0
    %804 = vmatpush2.msra.mxu0 0.0
    %805 = vmatprep.subr.mxu0 0.0
    %806 = vmatpush2.msra.mxu0 0.0
    %807 = vmatprep.subr.mxu0 0.0
    %808 = vmatpush2.msra.mxu0 0.0
    %809 = vmatprep.subr.mxu0 0.0
    %810 = vmatpush2.msra.mxu0 0.0
    %811 = vmatprep.subr.mxu0 0.0
    %812 = vmatpush2.msra.mxu0 0.0
    %813 = vmatprep.subr.mxu0 0.0
    %814 = vmatpush2.msra.mxu0 0.0
    %815 = vmatprep.subr.mxu0 0.0
    %816 = vmatpush2.msra.mxu0 0.0
    %817 = vmatprep.subr.mxu0 0.0
    %818 = vmatpush2.msra.mxu0 0.0
    %819 = vmatprep.subr.mxu0 0.0
    %820 = vmatpush2.msra.mxu0 0.0
    %821 = vmatprep.subr.mxu0 0.0
    %822 = vmatpush2.msra.mxu0 0.0
    %823 = vmatprep.subr.mxu0 0.0
    %824 = vmatpush2.msra.mxu0 0.0
    %825 = vmatprep.subr.mxu0 0.0
    %826 = vmatpush2.msra.mxu0 0.0
    %827 = vmatprep.mubr.f32.mxu0 0.0
    %828 = vmatmul.mubr.f32.gmra.mxu0 %v761
    %v829 = vpop.f32.mrf.mxu0
    %v830 = vadd.f32 %v759, %v829
    %v831 = vpop.f32.mrf.mxu0
    %832 = vdwg.mxu0
    %v833 = vmax.f32 %v830, 0.0
    %v835 = vsel %vm130, %v833, 0
    %837 = vmatprep.subr.mxu0 0.0
    %838 = vmatpush1.msra.mxu0 0.0
    %839 = vmatprep.subr.mxu0 0.0
    %840 = vmatpush1.msra.mxu0 0.0
    %841 = vmatprep.subr.mxu0 0.0
    %842 = vmatpush1.msra.mxu0 0.0
    %843 = vmatprep.subr.mxu0 0.0
    %844 = vmatpush1.msra.mxu0 0.0
    %845 = vmatprep.subr.mxu0 0.0
    %846 = vmatpush1.msra.mxu0 0.0
    %847 = vmatprep.subr.mxu0 0.0
    %848 = vmatpush1.msra.mxu0 0.0
    %849 = vmatprep.subr.mxu0 0.0
    %850 = vmatpush1.msra.mxu0 0.0
    %851 = vmatprep.subr.mxu0 0.0
    %852 = vmatpush1.msra.mxu0 0.0
    %853 = vmatprep.subr.mxu0 0.0
    %854 = vmatpush1.msra.mxu0 0.0
    %855 = vmatprep.subr.mxu0 0.0
    %856 = vmatpush1.msra.mxu0 0.0
    %857 = vmatprep.subr.mxu0 0.0
    %858 = vmatpush1.msra.mxu0 0.0
    %859 = vmatprep.subr.mxu0 0.0
    %860 = vmatpush1.msra.mxu0 0.0
    %861 = vmatprep.subr.mxu0 0.0
    %862 = vmatpush1.msra.mxu0 %v122
    %863 = vmatprep.subr.mxu0 0.0
    %864 = vmatpush1.msra.mxu0 %v121
    %865 = vmatprep.subr.mxu0 0.0
    %866 = vmatpush1.msra.mxu0 %v120
    %867 = vmatprep.subr.mxu0 0.0
    %868 = vmatpush1.msra.mxu0 %v119
    %869 = vmatprep.subr.mxu0 0.0
    %870 = vmatpush2.msra.mxu0 0.0
    %871 = vmatprep.subr.mxu0 0.0
    %872 = vmatpush2.msra.mxu0 0.0
    %873 = vmatprep.subr.mxu0 0.0
    %874 = vmatpush2.msra.mxu0 0.0
    %875 = vmatprep.subr.mxu0 0.0
    %876 = vmatpush2.msra.mxu0 0.0
    %877 = vmatprep.subr.mxu0 0.0
    %878 = vmatpush2.msra.mxu0 0.0
    %879 = vmatprep.subr.mxu0 0.0
    %880 = vmatpush2.msra.mxu0 0.0
    %881 = vmatprep.subr.mxu0 0.0
    %882 = vmatpush2.msra.mxu0 0.0
    %883 = vmatprep.subr.mxu0 0.0
    %884 = vmatpush2.msra.mxu0 0.0
    %885 = vmatprep.subr.mxu0 0.0
    %886 = vmatpush2.msra.mxu0 0.0
    %887 = vmatprep.subr.mxu0 0.0
    %888 = vmatpush2.msra.mxu0 0.0
    %889 = vmatprep.subr.mxu0 0.0
    %890 = vmatpush2.msra.mxu0 0.0
    %891 = vmatprep.subr.mxu0 0.0
    %892 = vmatpush2.msra.mxu0 0.0
    %893 = vmatprep.subr.mxu0 0.0
    %894 = vmatpush2.msra.mxu0 0.0
    %895 = vmatprep.subr.mxu0 0.0
    %896 = vmatpush2.msra.mxu0 0.0
    %897 = vmatprep.subr.mxu0 0.0
    %898 = vmatpush2.msra.mxu0 0.0
    %899 = vmatprep.subr.mxu0 0.0
    %900 = vmatpush2.msra.mxu0 0.0
    %901 = vmatprep.mubr.f32.mxu0 0.0
    %902 = vmatmul.mubr.f32.gmra.mxu0 %v835
    %v903 = vpop.f32.mrf.mxu0
    %v904 = vadd.f32 %v128, %v903
    %v905 = vpop.f32.mrf.mxu0
    %906 = vdwg.mxu0
    %v907 = vmax.f32 %v904, 0.0
    %v909 = vsel %vm130, %v907, 0
    %911 = vmatprep.subr.mxu0 0.0
    %912 = vmatpush1.msra.mxu0 0.0
    %913 = vmatprep.subr.mxu0 0.0
    %914 = vmatpush1.msra.mxu0 0.0
    %915 = vmatprep.subr.mxu0 0.0
    %916 = vmatpush1.msra.mxu0 0.0
    %917 = vmatprep.subr.mxu0 0.0
    %918 = vmatpush1.msra.mxu0 0.0
    %919 = vmatprep.subr.mxu0 0.0
    %920 = vmatpush1.msra.mxu0 0.0
    %921 = vmatprep.subr.mxu0 0.0
    %922 = vmatpush1.msra.mxu0 0.0
    %923 = vmatprep.subr.mxu0 0.0
    %924 = vmatpush1.msra.mxu0 0.0
    %925 = vmatprep.subr.mxu0 0.0
    %926 = vmatpush1.msra.mxu0 0.0
    %927 = vmatprep.subr.mxu0 0.0
    %928 = vmatpush1.msra.mxu0 0.0
    %929 = vmatprep.subr.mxu0 0.0
    %930 = vmatpush1.msra.mxu0 0.0
    %931 = vmatprep.subr.mxu0 0.0
    %932 = vmatpush1.msra.mxu0 0.0
    %933 = vmatprep.subr.mxu0 0.0
    %934 = vmatpush1.msra.mxu0 0.0
    %935 = vmatprep.subr.mxu0 0.0
    %936 = vmatpush1.msra.mxu0 %v208
    %937 = vmatprep.subr.mxu0 0.0
    %938 = vmatpush1.msra.mxu0 %v207
    %939 = vmatprep.subr.mxu0 0.0
    %940 = vmatpush1.msra.mxu0 %v206
    %941 = vmatprep.subr.mxu0 0.0
    %942 = vmatpush1.msra.mxu0 %v205
    %943 = vmatprep.subr.mxu0 0.0
    %944 = vmatpush2.msra.mxu0 0.0
    %945 = vmatprep.subr.mxu0 0.0
    %946 = vmatpush2.msra.mxu0 0.0
    %947 = vmatprep.subr.mxu0 0.0
    %948 = vmatpush2.msra.mxu0 0.0
    %949 = vmatprep.subr.mxu0 0.0
    %950 = vmatpush2.msra.mxu0 0.0
    %951 = vmatprep.subr.mxu0 0.0
    %952 = vmatpush2.msra.mxu0 0.0
    %953 = vmatprep.subr.mxu0 0.0
    %954 = vmatpush2.msra.mxu0 0.0
    %955 = vmatprep.subr.mxu0 0.0
    %956 = vmatpush2.msra.mxu0 0.0
    %957 = vmatprep.subr.mxu0 0.0
    %958 = vmatpush2.msra.mxu0 0.0
    %959 = vmatprep.subr.mxu0 0.0
    %960 = vmatpush2.msra.mxu0 0.0
    %961 = vmatprep.subr.mxu0 0.0
    %962 = vmatpush2.msra.mxu0 0.0
    %963 = vmatprep.subr.mxu0 0.0
    %964 = vmatpush2.msra.mxu0 0.0
    %965 = vmatprep.subr.mxu0 0.0
    %966 = vmatpush2.msra.mxu0 0.0
    %967 = vmatprep.subr.mxu0 0.0
    %968 = vmatpush2.msra.mxu0 0.0
    %969 = vmatprep.subr.mxu0 0.0
    %970 = vmatpush2.msra.mxu0 0.0
    %971 = vmatprep.subr.mxu0 0.0
    %972 = vmatpush2.msra.mxu0 0.0
    %973 = vmatprep.subr.mxu0 0.0
    %974 = vmatpush2.msra.mxu0 0.0
    %975 = vmatprep.mubr.f32.mxu0 0.0
    %976 = vmatmul.mubr.f32.gmra.mxu0 %v909
    %v977 = vpop.f32.mrf.mxu0
    %v978 = vadd.f32 %v214, %v977
    %v979 = vpop.f32.mrf.mxu0
    %980 = vdwg.mxu0
    %s981 = scalar_lea.vmem %s3, 6
    %v982 = vld [vmem:[%s981] sm:$0x3]
    %v983 = vsub.f32 %v978, %v982
    %s984 = sld [smem:[#allocation3 + $0x3]]
    %v985 = vmul.f32 %v983, %v983
    %v986 = vstv %s984
    %v987 = vmul.f32 %v986, %v985
    %v988 = vadd.f32 %v757, %v987
    %s989 = scalar_lea.vmem %s2, 8
    %v990 = vld [vmem:[%s989] sm:$0x3]
    %v992 = vsel %vm40, %v978, 0
    %994 = vmatprep.subr.mxu0 0.0
    %995 = vmatpush1.msra.mxu0 0.0
    %996 = vmatprep.subr.mxu0 0.0
    %997 = vmatpush1.msra.mxu0 0.0
    %998 = vmatprep.subr.mxu0 0.0
    %999 = vmatpush1.msra.mxu0 0.0
    %1000 = vmatprep.subr.mxu0 0.0
    %1001 = vmatpush1.msra.mxu0 0.0
    %1002 = vmatprep.subr.mxu0 0.0
    %1003 = vmatpush1.msra.mxu0 0.0
    %1004 = vmatprep.subr.mxu0 0.0
    %1005 = vmatpush1.msra.mxu0 0.0
    %1006 = vmatprep.subr.mxu0 0.0
    %1007 = vmatpush1.msra.mxu0 0.0
    %1008 = vmatprep.subr.mxu0 0.0
    %1009 = vmatpush1.msra.mxu0 0.0
    %1010 = vmatprep.subr.mxu0 0.0
    %1011 = vmatpush1.msra.mxu0 0.0
    %1012 = vmatprep.subr.mxu0 0.0
    %1013 = vmatpush1.msra.mxu0 0.0
    %1014 = vmatprep.subr.mxu0 0.0
    %1015 = vmatpush1.msra.mxu0 0.0
    %1016 = vmatprep.subr.mxu0 0.0
    %1017 = vmatpush1.msra.mxu0 0.0
    %1018 = vmatprep.subr.mxu0 0.0
    %1019 = vmatpush1.msra.mxu0 0.0
    %1020 = vmatprep.subr.mxu0 0.0
    %1021 = vmatpush1.msra.mxu0 0.0
    %1022 = vmatprep.subr.mxu0 0.0
    %1023 = vmatpush1.msra.mxu0 0.0
    %1024 = vmatprep.subr.mxu0 0.0
    %1025 = vmatpush1.msra.mxu0 %v46
    %1026 = vmatprep.subr.mxu0 0.0
    %1027 = vmatpush2.msra.mxu0 0.0
    %1028 = vmatprep.subr.mxu0 0.0
    %1029 = vmatpush2.msra.mxu0 0.0
    %1030 = vmatprep.subr.mxu0 0.0
    %1031 = vmatpush2.msra.mxu0 0.0
    %1032 = vmatprep.subr.mxu0 0.0
    %1033 = vmatpush2.msra.mxu0 0.0
    %1034 = vmatprep.subr.mxu0 0.0
    %1035 = vmatpush2.msra.mxu0 0.0
    %1036 = vmatprep.subr.mxu0 0.0
    %1037 = vmatpush2.msra.mxu0 0.0
    %1038 = vmatprep.subr.mxu0 0.0
    %1039 = vmatpush2.msra.mxu0 0.0
    %1040 = vmatprep.subr.mxu0 0.0
    %1041 = vmatpush2.msra.mxu0 0.0
    %1042 = vmatprep.subr.mxu0 0.0
    %1043 = vmatpush2.msra.mxu0 0.0
    %1044 = vmatprep.subr.mxu0 0.0
    %1045 = vmatpush2.msra.mxu0 0.0
    %1046 = vmatprep.subr.mxu0 0.0
    %1047 = vmatpush2.msra.mxu0 0.0
    %1048 = vmatprep.subr.mxu0 0.0
    %1049 = vmatpush2.msra.mxu0 0.0
    %1050 = vmatprep.subr.mxu0 0.0
    %1051 = vmatpush2.msra.mxu0 0.0
    %1052 = vmatprep.subr.mxu0 0.0
    %1053 = vmatpush2.msra.mxu0 0.0
    %1054 = vmatprep.subr.mxu0 0.0
    %1055 = vmatpush2.msra.mxu0 0.0
    %1056 = vmatprep.subr.mxu0 0.0
    %1057 = vmatpush2.msra.mxu0 0.0
    %1058 = vmatprep.mubr.f32.mxu0 0.0
    %1059 = vmatmul.mubr.f32.gmra.mxu0 %v992
    %v1060 = vpop.f32.mrf.mxu0
    %v1061 = vadd.f32 %v990, %v1060
    %v1062 = vpop.f32.mrf.mxu0
    %1063 = vdwg.mxu0
    %v1064 = vmax.f32 %v1061, 0.0
    %v1066 = vsel %vm130, %v1064, 0
    %1068 = vmatprep.subr.mxu0 0.0
    %1069 = vmatpush1.msra.mxu0 0.0
    %1070 = vmatprep.subr.mxu0 0.0
    %1071 = vmatpush1.msra.mxu0 0.0
    %1072 = vmatprep.subr.mxu0 0.0
    %1073 = vmatpush1.msra.mxu0 0.0
    %1074 = vmatprep.subr.mxu0 0.0
    %1075 = vmatpush1.msra.mxu0 0.0
    %1076 = vmatprep.subr.mxu0 0.0
    %1077 = vmatpush1.msra.mxu0 0.0
    %1078 = vmatprep.subr.mxu0 0.0
    %1079 = vmatpush1.msra.mxu0 0.0
    %1080 = vmatprep.subr.mxu0 0.0
    %1081 = vmatpush1.msra.mxu0 0.0
    %1082 = vmatprep.subr.mxu0 0.0
    %1083 = vmatpush1.msra.mxu0 0.0
    %1084 = vmatprep.subr.mxu0 0.0
    %1085 = vmatpush1.msra.mxu0 0.0
    %1086 = vmatprep.subr.mxu0 0.0
    %1087 = vmatpush1.msra.mxu0 0.0
    %1088 = vmatprep.subr.mxu0 0.0
    %1089 = vmatpush1.msra.mxu0 0.0
    %1090 = vmatprep.subr.mxu0 0.0
    %1091 = vmatpush1.msra.mxu0 0.0
    %1092 = vmatprep.subr.mxu0 0.0
    %1093 = vmatpush1.msra.mxu0 %v122
    %1094 = vmatprep.subr.mxu0 0.0
    %1095 = vmatpush1.msra.mxu0 %v121
    %1096 = vmatprep.subr.mxu0 0.0
    %1097 = vmatpush1.msra.mxu0 %v120
    %1098 = vmatprep.subr.mxu0 0.0
    %1099 = vmatpush1.msra.mxu0 %v119
    %1100 = vmatprep.subr.mxu0 0.0
    %1101 = vmatpush2.msra.mxu0 0.0
    %1102 = vmatprep.subr.mxu0 0.0
    %1103 = vmatpush2.msra.mxu0 0.0
    %1104 = vmatprep.subr.mxu0 0.0
    %1105 = vmatpush2.msra.mxu0 0.0
    %1106 = vmatprep.subr.mxu0 0.0
    %1107 = vmatpush2.msra.mxu0 0.0
    %1108 = vmatprep.subr.mxu0 0.0
    %1109 = vmatpush2.msra.mxu0 0.0
    %1110 = vmatprep.subr.mxu0 0.0
    %1111 = vmatpush2.msra.mxu0 0.0
    %1112 = vmatprep.subr.mxu0 0.0
    %1113 = vmatpush2.msra.mxu0 0.0
    %1114 = vmatprep.subr.mxu0 0.0
    %1115 = vmatpush2.msra.mxu0 0.0
    %1116 = vmatprep.subr.mxu0 0.0
    %1117 = vmatpush2.msra.mxu0 0.0
    %1118 = vmatprep.subr.mxu0 0.0
    %1119 = vmatpush2.msra.mxu0 0.0
    %1120 = vmatprep.subr.mxu0 0.0
    %1121 = vmatpush2.msra.mxu0 0.0
    %1122 = vmatprep.subr.mxu0 0.0
    %1123 = vmatpush2.msra.mxu0 0.0
    %1124 = vmatprep.subr.mxu0 0.0
    %1125 = vmatpush2.msra.mxu0 0.0
    %1126 = vmatprep.subr.mxu0 0.0
    %1127 = vmatpush2.msra.mxu0 0.0
    %1128 = vmatprep.subr.mxu0 0.0
    %1129 = vmatpush2.msra.mxu0 0.0
    %1130 = vmatprep.subr.mxu0 0.0
    %1131 = vmatpush2.msra.mxu0 0.0
    %1132 = vmatprep.mubr.f32.mxu0 0.0
    %1133 = vmatmul.mubr.f32.gmra.mxu0 %v1066
    %v1134 = vpop.f32.mrf.mxu0
    %v1135 = vadd.f32 %v128, %v1134
    %v1136 = vpop.f32.mrf.mxu0
    %1137 = vdwg.mxu0
    %v1138 = vmax.f32 %v1135, 0.0
    %v1140 = vsel %vm130, %v1138, 0
    %1142 = vmatprep.subr.mxu0 0.0
    %1143 = vmatpush1.msra.mxu0 0.0
    %1144 = vmatprep.subr.mxu0 0.0
    %1145 = vmatpush1.msra.mxu0 0.0
    %1146 = vmatprep.subr.mxu0 0.0
    %1147 = vmatpush1.msra.mxu0 0.0
    %1148 = vmatprep.subr.mxu0 0.0
    %1149 = vmatpush1.msra.mxu0 0.0
    %1150 = vmatprep.subr.mxu0 0.0
    %1151 = vmatpush1.msra.mxu0 0.0
    %1152 = vmatprep.subr.mxu0 0.0
    %1153 = vmatpush1.msra.mxu0 0.0
    %1154 = vmatprep.subr.mxu0 0.0
    %1155 = vmatpush1.msra.mxu0 0.0
    %1156 = vmatprep.subr.mxu0 0.0
    %1157 = vmatpush1.msra.mxu0 0.0
    %1158 = vmatprep.subr.mxu0 0.0
    %1159 = vmatpush1.msra.mxu0 0.0
    %1160 = vmatprep.subr.mxu0 0.0
    %1161 = vmatpush1.msra.mxu0 0.0
    %1162 = vmatprep.subr.mxu0 0.0
    %1163 = vmatpush1.msra.mxu0 0.0
    %1164 = vmatprep.subr.mxu0 0.0
    %1165 = vmatpush1.msra.mxu0 0.0
    %1166 = vmatprep.subr.mxu0 0.0
    %1167 = vmatpush1.msra.mxu0 %v208
    %1168 = vmatprep.subr.mxu0 0.0
    %1169 = vmatpush1.msra.mxu0 %v207
    %1170 = vmatprep.subr.mxu0 0.0
    %1171 = vmatpush1.msra.mxu0 %v206
    %1172 = vmatprep.subr.mxu0 0.0
    %1173 = vmatpush1.msra.mxu0 %v205
    %1174 = vmatprep.subr.mxu0 0.0
    %1175 = vmatpush2.msra.mxu0 0.0
    %1176 = vmatprep.subr.mxu0 0.0
    %1177 = vmatpush2.msra.mxu0 0.0
    %1178 = vmatprep.subr.mxu0 0.0
    %1179 = vmatpush2.msra.mxu0 0.0
    %1180 = vmatprep.subr.mxu0 0.0
    %1181 = vmatpush2.msra.mxu0 0.0
    %1182 = vmatprep.subr.mxu0 0.0
    %1183 = vmatpush2.msra.mxu0 0.0
    %1184 = vmatprep.subr.mxu0 0.0
    %1185 = vmatpush2.msra.mxu0 0.0
    %1186 = vmatprep.subr.mxu0 0.0
    %1187 = vmatpush2.msra.mxu0 0.0
    %1188 = vmatprep.subr.mxu0 0.0
    %1189 = vmatpush2.msra.mxu0 0.0
    %1190 = vmatprep.subr.mxu0 0.0
    %1191 = vmatpush2.msra.mxu0 0.0
    %1192 = vmatprep.subr.mxu0 0.0
    %1193 = vmatpush2.msra.mxu0 0.0
    %1194 = vmatprep.subr.mxu0 0.0
    %1195 = vmatpush2.msra.mxu0 0.0
    %1196 = vmatprep.subr.mxu0 0.0
    %1197 = vmatpush2.msra.mxu0 0.0
    %1198 = vmatprep.subr.mxu0 0.0
    %1199 = vmatpush2.msra.mxu0 0.0
    %1200 = vmatprep.subr.mxu0 0.0
    %1201 = vmatpush2.msra.mxu0 0.0
    %1202 = vmatprep.subr.mxu0 0.0
    %1203 = vmatpush2.msra.mxu0 0.0
    %1204 = vmatprep.subr.mxu0 0.0
    %1205 = vmatpush2.msra.mxu0 0.0
    %1206 = vmatprep.mubr.f32.mxu0 0.0
    %1207 = vmatmul.mubr.f32.gmra.mxu0 %v1140
    %v1208 = vpop.f32.mrf.mxu0
    %v1209 = vadd.f32 %v214, %v1208
    %v1210 = vpop.f32.mrf.mxu0
    %1211 = vdwg.mxu0
    %s1212 = scalar_lea.vmem %s3, 8
    %v1213 = vld [vmem:[%s1212] sm:$0x3]
    %v1214 = vsub.f32 %v1209, %v1213
    %s1215 = sld [smem:[#allocation3 + $0x4]]
    %v1216 = vmul.f32 %v1214, %v1214
    %v1217 = vstv %s1215
    %v1218 = vmul.f32 %v1217, %v1216
    %v1219 = vadd.f32 %v988, %v1218
    %s1220 = scalar_lea.vmem %s2, 10
    %v1221 = vld [vmem:[%s1220] sm:$0x3]
    %v1223 = vsel %vm40, %v1209, 0
    %1225 = vmatprep.subr.mxu0 0.0
    %1226 = vmatpush1.msra.mxu0 0.0
    %1227 = vmatprep.subr.mxu0 0.0
    %1228 = vmatpush1.msra.mxu0 0.0
    %1229 = vmatprep.subr.mxu0 0.0
    %1230 = vmatpush1.msra.mxu0 0.0
    %1231 = vmatprep.subr.mxu0 0.0
    %1232 = vmatpush1.msra.mxu0 0.0
    %1233 = vmatprep.subr.mxu0 0.0
    %1234 = vmatpush1.msra.mxu0 0.0
    %1235 = vmatprep.subr.mxu0 0.0
    %1236 = vmatpush1.msra.mxu0 0.0
    %1237 = vmatprep.subr.mxu0 0.0
    %1238 = vmatpush1.msra.mxu0 0.0
    %1239 = vmatprep.subr.mxu0 0.0
    %1240 = vmatpush1.msra.mxu0 0.0
    %1241 = vmatprep.subr.mxu0 0.0
    %1242 = vmatpush1.msra.mxu0 0.0
    %1243 = vmatprep.subr.mxu0 0.0
    %1244 = vmatpush1.msra.mxu0 0.0
    %1245 = vmatprep.subr.mxu0 0.0
    %1246 = vmatpush1.msra.mxu0 0.0
    %1247 = vmatprep.subr.mxu0 0.0
    %1248 = vmatpush1.msra.mxu0 0.0
    %1249 = vmatprep.subr.mxu0 0.0
    %1250 = vmatpush1.msra.mxu0 0.0
    %1251 = vmatprep.subr.mxu0 0.0
    %1252 = vmatpush1.msra.mxu0 0.0
    %1253 = vmatprep.subr.mxu0 0.0
    %1254 = vmatpush1.msra.mxu0 0.0
    %1255 = vmatprep.subr.mxu0 0.0
    %1256 = vmatpush1.msra.mxu0 %v46
    %1257 = vmatprep.subr.mxu0 0.0
    %1258 = vmatpush2.msra.mxu0 0.0
    %1259 = vmatprep.subr.mxu0 0.0
    %1260 = vmatpush2.msra.mxu0 0.0
    %1261 = vmatprep.subr.mxu0 0.0
    %1262 = vmatpush2.msra.mxu0 0.0
    %1263 = vmatprep.subr.mxu0 0.0
    %1264 = vmatpush2.msra.mxu0 0.0
    %1265 = vmatprep.subr.mxu0 0.0
    %1266 = vmatpush2.msra.mxu0 0.0
    %1267 = vmatprep.subr.mxu0 0.0
    %1268 = vmatpush2.msra.mxu0 0.0
    %1269 = vmatprep.subr.mxu0 0.0
    %1270 = vmatpush2.msra.mxu0 0.0
    %1271 = vmatprep.subr.mxu0 0.0
    %1272 = vmatpush2.msra.mxu0 0.0
    %1273 = vmatprep.subr.mxu0 0.0
    %1274 = vmatpush2.msra.mxu0 0.0
    %1275 = vmatprep.subr.mxu0 0.0
    %1276 = vmatpush2.msra.mxu0 0.0
    %1277 = vmatprep.subr.mxu0 0.0
    %1278 = vmatpush2.msra.mxu0 0.0
    %1279 = vmatprep.subr.mxu0 0.0
    %1280 = vmatpush2.msra.mxu0 0.0
    %1281 = vmatprep.subr.mxu0 0.0
    %1282 = vmatpush2.msra.mxu0 0.0
    %1283 = vmatprep.subr.mxu0 0.0
    %1284 = vmatpush2.msra.mxu0 0.0
    %1285 = vmatprep.subr.mxu0 0.0
    %1286 = vmatpush2.msra.mxu0 0.0
    %1287 = vmatprep.subr.mxu0 0.0
    %1288 = vmatpush2.msra.mxu0 0.0
    %1289 = vmatprep.mubr.f32.mxu0 0.0
    %1290 = vmatmul.mubr.f32.gmra.mxu0 %v1223
    %v1291 = vpop.f32.mrf.mxu0
    %v1292 = vadd.f32 %v1221, %v1291
    %v1293 = vpop.f32.mrf.mxu0
    %1294 = vdwg.mxu0
    %v1295 = vmax.f32 %v1292, 0.0
    %v1297 = vsel %vm130, %v1295, 0
    %1299 = vmatprep.subr.mxu0 0.0
    %1300 = vmatpush1.msra.mxu0 0.0
    %1301 = vmatprep.subr.mxu0 0.0
    %1302 = vmatpush1.msra.mxu0 0.0
    %1303 = vmatprep.subr.mxu0 0.0
    %1304 = vmatpush1.msra.mxu0 0.0
    %1305 = vmatprep.subr.mxu0 0.0
    %1306 = vmatpush1.msra.mxu0 0.0
    %1307 = vmatprep.subr.mxu0 0.0
    %1308 = vmatpush1.msra.mxu0 0.0
    %1309 = vmatprep.subr.mxu0 0.0
    %1310 = vmatpush1.msra.mxu0 0.0
    %1311 = vmatprep.subr.mxu0 0.0
    %1312 = vmatpush1.msra.mxu0 0.0
    %1313 = vmatprep.subr.mxu0 0.0
    %1314 = vmatpush1.msra.mxu0 0.0
    %1315 = vmatprep.subr.mxu0 0.0
    %1316 = vmatpush1.msra.mxu0 0.0
    %1317 = vmatprep.subr.mxu0 0.0
    %1318 = vmatpush1.msra.mxu0 0.0
    %1319 = vmatprep.subr.mxu0 0.0
    %1320 = vmatpush1.msra.mxu0 0.0
    %1321 = vmatprep.subr.mxu0 0.0
    %1322 = vmatpush1.msra.mxu0 0.0
    %1323 = vmatprep.subr.mxu0 0.0
    %1324 = vmatpush1.msra.mxu0 %v122
    %1325 = vmatprep.subr.mxu0 0.0
    %1326 = vmatpush1.msra.mxu0 %v121
    %1327 = vmatprep.subr.mxu0 0.0
    %1328 = vmatpush1.msra.mxu0 %v120
    %1329 = vmatprep.subr.mxu0 0.0
    %1330 = vmatpush1.msra.mxu0 %v119
    %1331 = vmatprep.subr.mxu0 0.0
    %1332 = vmatpush2.msra.mxu0 0.0
    %1333 = vmatprep.subr.mxu0 0.0
    %1334 = vmatpush2.msra.mxu0 0.0
    %1335 = vmatprep.subr.mxu0 0.0
    %1336 = vmatpush2.msra.mxu0 0.0
    %1337 = vmatprep.subr.mxu0 0.0
    %1338 = vmatpush2.msra.mxu0 0.0
    %1339 = vmatprep.subr.mxu0 0.0
    %1340 = vmatpush2.msra.mxu0 0.0
    %1341 = vmatprep.subr.mxu0 0.0
    %1342 = vmatpush2.msra.mxu0 0.0
    %1343 = vmatprep.subr.mxu0 0.0
    %1344 = vmatpush2.msra.mxu0 0.0
    %1345 = vmatprep.subr.mxu0 0.0
    %1346 = vmatpush2.msra.mxu0 0.0
    %1347 = vmatprep.subr.mxu0 0.0
    %1348 = vmatpush2.msra.mxu0 0.0
    %1349 = vmatprep.subr.mxu0 0.0
    %1350 = vmatpush2.msra.mxu0 0.0
    %1351 = vmatprep.subr.mxu0 0.0
    %1352 = vmatpush2.msra.mxu0 0.0
    %1353 = vmatprep.subr.mxu0 0.0
    %1354 = vmatpush2.msra.mxu0 0.0
    %1355 = vmatprep.subr.mxu0 0.0
    %1356 = vmatpush2.msra.mxu0 0.0
    %1357 = vmatprep.subr.mxu0 0.0
    %1358 = vmatpush2.msra.mxu0 0.0
    %1359 = vmatprep.subr.mxu0 0.0
    %1360 = vmatpush2.msra.mxu0 0.0
    %1361 = vmatprep.subr.mxu0 0.0
    %1362 = vmatpush2.msra.mxu0 0.0
    %1363 = vmatprep.mubr.f32.mxu0 0.0
    %1364 = vmatmul.mubr.f32.gmra.mxu0 %v1297
    %v1365 = vpop.f32.mrf.mxu0
    %v1366 = vadd.f32 %v128, %v1365
    %v1367 = vpop.f32.mrf.mxu0
    %1368 = vdwg.mxu0
    %v1369 = vmax.f32 %v1366, 0.0
    %v1371 = vsel %vm130, %v1369, 0
    %1373 = vmatprep.subr.mxu0 0.0
    %1374 = vmatpush1.msra.mxu0 0.0
    %1375 = vmatprep.subr.mxu0 0.0
    %1376 = vmatpush1.msra.mxu0 0.0
    %1377 = vmatprep.subr.mxu0 0.0
    %1378 = vmatpush1.msra.mxu0 0.0
    %1379 = vmatprep.subr.mxu0 0.0
    %1380 = vmatpush1.msra.mxu0 0.0
    %1381 = vmatprep.subr.mxu0 0.0
    %1382 = vmatpush1.msra.mxu0 0.0
    %1383 = vmatprep.subr.mxu0 0.0
    %1384 = vmatpush1.msra.mxu0 0.0
    %1385 = vmatprep.subr.mxu0 0.0
    %1386 = vmatpush1.msra.mxu0 0.0
    %1387 = vmatprep.subr.mxu0 0.0
    %1388 = vmatpush1.msra.mxu0 0.0
    %1389 = vmatprep.subr.mxu0 0.0
    %1390 = vmatpush1.msra.mxu0 0.0
    %1391 = vmatprep.subr.mxu0 0.0
    %1392 = vmatpush1.msra.mxu0 0.0
    %1393 = vmatprep.subr.mxu0 0.0
    %1394 = vmatpush1.msra.mxu0 0.0
    %1395 = vmatprep.subr.mxu0 0.0
    %1396 = vmatpush1.msra.mxu0 0.0
    %1397 = vmatprep.subr.mxu0 0.0
    %1398 = vmatpush1.msra.mxu0 %v208
    %1399 = vmatprep.subr.mxu0 0.0
    %1400 = vmatpush1.msra.mxu0 %v207
    %1401 = vmatprep.subr.mxu0 0.0
    %1402 = vmatpush1.msra.mxu0 %v206
    %1403 = vmatprep.subr.mxu0 0.0
    %1404 = vmatpush1.msra.mxu0 %v205
    %1405 = vmatprep.subr.mxu0 0.0
    %1406 = vmatpush2.msra.mxu0 0.0
    %1407 = vmatprep.subr.mxu0 0.0
    %1408 = vmatpush2.msra.mxu0 0.0
    %1409 = vmatprep.subr.mxu0 0.0
    %1410 = vmatpush2.msra.mxu0 0.0
    %1411 = vmatprep.subr.mxu0 0.0
    %1412 = vmatpush2.msra.mxu0 0.0
    %1413 = vmatprep.subr.mxu0 0.0
    %1414 = vmatpush2.msra.mxu0 0.0
    %1415 = vmatprep.subr.mxu0 0.0
    %1416 = vmatpush2.msra.mxu0 0.0
    %1417 = vmatprep.subr.mxu0 0.0
    %1418 = vmatpush2.msra.mxu0 0.0
    %1419 = vmatprep.subr.mxu0 0.0
    %1420 = vmatpush2.msra.mxu0 0.0
    %1421 = vmatprep.subr.mxu0 0.0
    %1422 = vmatpush2.msra.mxu0 0.0
    %1423 = vmatprep.subr.mxu0 0.0
    %1424 = vmatpush2.msra.mxu0 0.0
    %1425 = vmatprep.subr.mxu0 0.0
    %1426 = vmatpush2.msra.mxu0 0.0
    %1427 = vmatprep.subr.mxu0 0.0
    %1428 = vmatpush2.msra.mxu0 0.0
    %1429 = vmatprep.subr.mxu0 0.0
    %1430 = vmatpush2.msra.mxu0 0.0
    %1431 = vmatprep.subr.mxu0 0.0
    %1432 = vmatpush2.msra.mxu0 0.0
    %1433 = vmatprep.subr.mxu0 0.0
    %1434 = vmatpush2.msra.mxu0 0.0
    %1435 = vmatprep.subr.mxu0 0.0
    %1436 = vmatpush2.msra.mxu0 0.0
    %1437 = vmatprep.mubr.f32.mxu0 0.0
    %1438 = vmatmul.mubr.f32.gmra.mxu0 %v1371
    %v1439 = vpop.f32.mrf.mxu0
    %v1440 = vadd.f32 %v214, %v1439
    %v1441 = vpop.f32.mrf.mxu0
    %1442 = vdwg.mxu0
    %s1443 = scalar_lea.vmem %s3, 10
    %v1444 = vld [vmem:[%s1443] sm:$0x3]
    %v1445 = vsub.f32 %v1440, %v1444
    %s1446 = sld [smem:[#allocation3 + $0x5]]
    %v1447 = vmul.f32 %v1445, %v1445
    %v1448 = vstv %s1446
    %v1449 = vmul.f32 %v1448, %v1447
    %v1450 = vadd.f32 %v1219, %v1449
    %s1451 = scalar_lea.vmem %s2, 12
    %v1452 = vld [vmem:[%s1451] sm:$0x3]
    %v1454 = vsel %vm40, %v1440, 0
    %1456 = vmatprep.subr.mxu0 0.0
    %1457 = vmatpush1.msra.mxu0 0.0
    %1458 = vmatprep.subr.mxu0 0.0
    %1459 = vmatpush1.msra.mxu0 0.0
    %1460 = vmatprep.subr.mxu0 0.0
    %1461 = vmatpush1.msra.mxu0 0.0
    %1462 = vmatprep.subr.mxu0 0.0
    %1463 = vmatpush1.msra.mxu0 0.0
    %1464 = vmatprep.subr.mxu0 0.0
    %1465 = vmatpush1.msra.mxu0 0.0
    %1466 = vmatprep.subr.mxu0 0.0
    %1467 = vmatpush1.msra.mxu0 0.0
    %1468 = vmatprep.subr.mxu0 0.0
    %1469 = vmatpush1.msra.mxu0 0.0
    %1470 = vmatprep.subr.mxu0 0.0
    %1471 = vmatpush1.msra.mxu0 0.0
    %1472 = vmatprep.subr.mxu0 0.0
    %1473 = vmatpush1.msra.mxu0 0.0
    %1474 = vmatprep.subr.mxu0 0.0
    %1475 = vmatpush1.msra.mxu0 0.0
    %1476 = vmatprep.subr.mxu0 0.0
    %1477 = vmatpush1.msra.mxu0 0.0
    %1478 = vmatprep.subr.mxu0 0.0
    %1479 = vmatpush1.msra.mxu0 0.0
    %1480 = vmatprep.subr.mxu0 0.0
    %1481 = vmatpush1.msra.mxu0 0.0
    %1482 = vmatprep.subr.mxu0 0.0
    %1483 = vmatpush1.msra.mxu0 0.0
    %1484 = vmatprep.subr.mxu0 0.0
    %1485 = vmatpush1.msra.mxu0 0.0
    %1486 = vmatprep.subr.mxu0 0.0
    %1487 = vmatpush1.msra.mxu0 %v46
    %1488 = vmatprep.subr.mxu0 0.0
    %1489 = vmatpush2.msra.mxu0 0.0
    %1490 = vmatprep.subr.mxu0 0.0
    %1491 = vmatpush2.msra.mxu0 0.0
    %1492 = vmatprep.subr.mxu0 0.0
    %1493 = vmatpush2.msra.mxu0 0.0
    %1494 = vmatprep.subr.mxu0 0.0
    %1495 = vmatpush2.msra.mxu0 0.0
    %1496 = vmatprep.subr.mxu0 0.0
    %1497 = vmatpush2.msra.mxu0 0.0
    %1498 = vmatprep.subr.mxu0 0.0
    %1499 = vmatpush2.msra.mxu0 0.0
    %1500 = vmatprep.subr.mxu0 0.0
    %1501 = vmatpush2.msra.mxu0 0.0
    %1502 = vmatprep.subr.mxu0 0.0
    %1503 = vmatpush2.msra.mxu0 0.0
    %1504 = vmatprep.subr.mxu0 0.0
    %1505 = vmatpush2.msra.mxu0 0.0
    %1506 = vmatprep.subr.mxu0 0.0
    %1507 = vmatpush2.msra.mxu0 0.0
    %1508 = vmatprep.subr.mxu0 0.0
    %1509 = vmatpush2.msra.mxu0 0.0
    %1510 = vmatprep.subr.mxu0 0.0
    %1511 = vmatpush2.msra.mxu0 0.0
    %1512 = vmatprep.subr.mxu0 0.0
    %1513 = vmatpush2.msra.mxu0 0.0
    %1514 = vmatprep.subr.mxu0 0.0
    %1515 = vmatpush2.msra.mxu0 0.0
    %1516 = vmatprep.subr.mxu0 0.0
    %1517 = vmatpush2.msra.mxu0 0.0
    %1518 = vmatprep.subr.mxu0 0.0
    %1519 = vmatpush2.msra.mxu0 0.0
    %1520 = vmatprep.mubr.f32.mxu0 0.0
    %1521 = vmatmul.mubr.f32.gmra.mxu0 %v1454
    %v1522 = vpop.f32.mrf.mxu0
    %v1523 = vadd.f32 %v1452, %v1522
    %v1524 = vpop.f32.mrf.mxu0
    %1525 = vdwg.mxu0
    %v1526 = vmax.f32 %v1523, 0.0
    %v1528 = vsel %vm130, %v1526, 0
    %1530 = vmatprep.subr.mxu0 0.0
    %1531 = vmatpush1.msra.mxu0 0.0
    %1532 = vmatprep.subr.mxu0 0.0
    %1533 = vmatpush1.msra.mxu0 0.0
    %1534 = vmatprep.subr.mxu0 0.0
    %1535 = vmatpush1.msra.mxu0 0.0
    %1536 = vmatprep.subr.mxu0 0.0
    %1537 = vmatpush1.msra.mxu0 0.0
    %1538 = vmatprep.subr.mxu0 0.0
    %1539 = vmatpush1.msra.mxu0 0.0
    %1540 = vmatprep.subr.mxu0 0.0
    %1541 = vmatpush1.msra.mxu0 0.0
    %1542 = vmatprep.subr.mxu0 0.0
    %1543 = vmatpush1.msra.mxu0 0.0
    %1544 = vmatprep.subr.mxu0 0.0
    %1545 = vmatpush1.msra.mxu0 0.0
    %1546 = vmatprep.subr.mxu0 0.0
    %1547 = vmatpush1.msra.mxu0 0.0
    %1548 = vmatprep.subr.mxu0 0.0
    %1549 = vmatpush1.msra.mxu0 0.0
    %1550 = vmatprep.subr.mxu0 0.0
    %1551 = vmatpush1.msra.mxu0 0.0
    %1552 = vmatprep.subr.mxu0 0.0
    %1553 = vmatpush1.msra.mxu0 0.0
    %1554 = vmatprep.subr.mxu0 0.0
    %1555 = vmatpush1.msra.mxu0 %v122
    %1556 = vmatprep.subr.mxu0 0.0
    %1557 = vmatpush1.msra.mxu0 %v121
    %1558 = vmatprep.subr.mxu0 0.0
    %1559 = vmatpush1.msra.mxu0 %v120
    %1560 = vmatprep.subr.mxu0 0.0
    %1561 = vmatpush1.msra.mxu0 %v119
    %1562 = vmatprep.subr.mxu0 0.0
    %1563 = vmatpush2.msra.mxu0 0.0
    %1564 = vmatprep.subr.mxu0 0.0
    %1565 = vmatpush2.msra.mxu0 0.0
    %1566 = vmatprep.subr.mxu0 0.0
    %1567 = vmatpush2.msra.mxu0 0.0
    %1568 = vmatprep.subr.mxu0 0.0
    %1569 = vmatpush2.msra.mxu0 0.0
    %1570 = vmatprep.subr.mxu0 0.0
    %1571 = vmatpush2.msra.mxu0 0.0
    %1572 = vmatprep.subr.mxu0 0.0
    %1573 = vmatpush2.msra.mxu0 0.0
    %1574 = vmatprep.subr.mxu0 0.0
    %1575 = vmatpush2.msra.mxu0 0.0
    %1576 = vmatprep.subr.mxu0 0.0
    %1577 = vmatpush2.msra.mxu0 0.0
    %1578 = vmatprep.subr.mxu0 0.0
    %1579 = vmatpush2.msra.mxu0 0.0
    %1580 = vmatprep.subr.mxu0 0.0
    %1581 = vmatpush2.msra.mxu0 0.0
    %1582 = vmatprep.subr.mxu0 0.0
    %1583 = vmatpush2.msra.mxu0 0.0
    %1584 = vmatprep.subr.mxu0 0.0
    %1585 = vmatpush2.msra.mxu0 0.0
    %1586 = vmatprep.subr.mxu0 0.0
    %1587 = vmatpush2.msra.mxu0 0.0
    %1588 = vmatprep.subr.mxu0 0.0
    %1589 = vmatpush2.msra.mxu0 0.0
    %1590 = vmatprep.subr.mxu0 0.0
    %1591 = vmatpush2.msra.mxu0 0.0
    %1592 = vmatprep.subr.mxu0 0.0
    %1593 = vmatpush2.msra.mxu0 0.0
    %1594 = vmatprep.mubr.f32.mxu0 0.0
    %1595 = vmatmul.mubr.f32.gmra.mxu0 %v1528
    %v1596 = vpop.f32.mrf.mxu0
    %v1597 = vadd.f32 %v128, %v1596
    %v1598 = vpop.f32.mrf.mxu0
    %1599 = vdwg.mxu0
    %v1600 = vmax.f32 %v1597, 0.0
    %v1602 = vsel %vm130, %v1600, 0
    %1604 = vmatprep.subr.mxu0 0.0
    %1605 = vmatpush1.msra.mxu0 0.0
    %1606 = vmatprep.subr.mxu0 0.0
    %1607 = vmatpush1.msra.mxu0 0.0
    %1608 = vmatprep.subr.mxu0 0.0
    %1609 = vmatpush1.msra.mxu0 0.0
    %1610 = vmatprep.subr.mxu0 0.0
    %1611 = vmatpush1.msra.mxu0 0.0
    %1612 = vmatprep.subr.mxu0 0.0
    %1613 = vmatpush1.msra.mxu0 0.0
    %1614 = vmatprep.subr.mxu0 0.0
    %1615 = vmatpush1.msra.mxu0 0.0
    %1616 = vmatprep.subr.mxu0 0.0
    %1617 = vmatpush1.msra.mxu0 0.0
    %1618 = vmatprep.subr.mxu0 0.0
    %1619 = vmatpush1.msra.mxu0 0.0
    %1620 = vmatprep.subr.mxu0 0.0
    %1621 = vmatpush1.msra.mxu0 0.0
    %1622 = vmatprep.subr.mxu0 0.0
    %1623 = vmatpush1.msra.mxu0 0.0
    %1624 = vmatprep.subr.mxu0 0.0
    %1625 = vmatpush1.msra.mxu0 0.0
    %1626 = vmatprep.subr.mxu0 0.0
    %1627 = vmatpush1.msra.mxu0 0.0
    %1628 = vmatprep.subr.mxu0 0.0
    %1629 = vmatpush1.msra.mxu0 %v208
    %1630 = vmatprep.subr.mxu0 0.0
    %1631 = vmatpush1.msra.mxu0 %v207
    %1632 = vmatprep.subr.mxu0 0.0
    %1633 = vmatpush1.msra.mxu0 %v206
    %1634 = vmatprep.subr.mxu0 0.0
    %1635 = vmatpush1.msra.mxu0 %v205
    %1636 = vmatprep.subr.mxu0 0.0
    %1637 = vmatpush2.msra.mxu0 0.0
    %1638 = vmatprep.subr.mxu0 0.0
    %1639 = vmatpush2.msra.mxu0 0.0
    %1640 = vmatprep.subr.mxu0 0.0
    %1641 = vmatpush2.msra.mxu0 0.0
    %1642 = vmatprep.subr.mxu0 0.0
    %1643 = vmatpush2.msra.mxu0 0.0
    %1644 = vmatprep.subr.mxu0 0.0
    %1645 = vmatpush2.msra.mxu0 0.0
    %1646 = vmatprep.subr.mxu0 0.0
    %1647 = vmatpush2.msra.mxu0 0.0
    %1648 = vmatprep.subr.mxu0 0.0
    %1649 = vmatpush2.msra.mxu0 0.0
    %1650 = vmatprep.subr.mxu0 0.0
    %1651 = vmatpush2.msra.mxu0 0.0
    %1652 = vmatprep.subr.mxu0 0.0
    %1653 = vmatpush2.msra.mxu0 0.0
    %1654 = vmatprep.subr.mxu0 0.0
    %1655 = vmatpush2.msra.mxu0 0.0
    %1656 = vmatprep.subr.mxu0 0.0
    %1657 = vmatpush2.msra.mxu0 0.0
    %1658 = vmatprep.subr.mxu0 0.0
    %1659 = vmatpush2.msra.mxu0 0.0
    %1660 = vmatprep.subr.mxu0 0.0
    %1661 = vmatpush2.msra.mxu0 0.0
    %1662 = vmatprep.subr.mxu0 0.0
    %1663 = vmatpush2.msra.mxu0 0.0
    %1664 = vmatprep.subr.mxu0 0.0
    %1665 = vmatpush2.msra.mxu0 0.0
    %1666 = vmatprep.subr.mxu0 0.0
    %1667 = vmatpush2.msra.mxu0 0.0
    %1668 = vmatprep.mubr.f32.mxu0 0.0
    %1669 = vmatmul.mubr.f32.gmra.mxu0 %v1602
    %v1670 = vpop.f32.mrf.mxu0
    %v1671 = vadd.f32 %v214, %v1670
    %v1672 = vpop.f32.mrf.mxu0
    %1673 = vdwg.mxu0
    %s1674 = scalar_lea.vmem %s3, 12
    %v1675 = vld [vmem:[%s1674] sm:$0x3]
    %v1676 = vsub.f32 %v1671, %v1675
    %s1677 = sld [smem:[#allocation3 + $0x6]]
    %v1678 = vmul.f32 %v1676, %v1676
    %v1679 = vstv %s1677
    %v1680 = vmul.f32 %v1679, %v1678
    %v1681 = vadd.f32 %v1450, %v1680
    %s1682 = scalar_lea.vmem %s2, 14
    %v1683 = vld [vmem:[%s1682] sm:$0x3]
    %v1685 = vsel %vm40, %v1671, 0
    %1687 = vmatprep.subr.mxu0 0.0
    %1688 = vmatpush1.msra.mxu0 0.0
    %1689 = vmatprep.subr.mxu0 0.0
    %1690 = vmatpush1.msra.mxu0 0.0
    %1691 = vmatprep.subr.mxu0 0.0
    %1692 = vmatpush1.msra.mxu0 0.0
    %1693 = vmatprep.subr.mxu0 0.0
    %1694 = vmatpush1.msra.mxu0 0.0
    %1695 = vmatprep.subr.mxu0 0.0
    %1696 = vmatpush1.msra.mxu0 0.0
    %1697 = vmatprep.subr.mxu0 0.0
    %1698 = vmatpush1.msra.mxu0 0.0
    %1699 = vmatprep.subr.mxu0 0.0
    %1700 = vmatpush1.msra.mxu0 0.0
    %1701 = vmatprep.subr.mxu0 0.0
    %1702 = vmatpush1.msra.mxu0 0.0
    %1703 = vmatprep.subr.mxu0 0.0
    %1704 = vmatpush1.msra.mxu0 0.0
    %1705 = vmatprep.subr.mxu0 0.0
    %1706 = vmatpush1.msra.mxu0 0.0
    %1707 = vmatprep.subr.mxu0 0.0
    %1708 = vmatpush1.msra.mxu0 0.0
    %1709 = vmatprep.subr.mxu0 0.0
    %1710 = vmatpush1.msra.mxu0 0.0
    %1711 = vmatprep.subr.mxu0 0.0
    %1712 = vmatpush1.msra.mxu0 0.0
    %1713 = vmatprep.subr.mxu0 0.0
    %1714 = vmatpush1.msra.mxu0 0.0
    %1715 = vmatprep.subr.mxu0 0.0
    %1716 = vmatpush1.msra.mxu0 0.0
    %1717 = vmatprep.subr.mxu0 0.0
    %1718 = vmatpush1.msra.mxu0 %v46
    %1719 = vmatprep.subr.mxu0 0.0
    %1720 = vmatpush2.msra.mxu0 0.0
    %1721 = vmatprep.subr.mxu0 0.0
    %1722 = vmatpush2.msra.mxu0 0.0
    %1723 = vmatprep.subr.mxu0 0.0
    %1724 = vmatpush2.msra.mxu0 0.0
    %1725 = vmatprep.subr.mxu0 0.0
    %1726 = vmatpush2.msra.mxu0 0.0
    %1727 = vmatprep.subr.mxu0 0.0
    %1728 = vmatpush2.msra.mxu0 0.0
    %1729 = vmatprep.subr.mxu0 0.0
    %1730 = vmatpush2.msra.mxu0 0.0
    %1731 = vmatprep.subr.mxu0 0.0
    %1732 = vmatpush2.msra.mxu0 0.0
    %1733 = vmatprep.subr.mxu0 0.0
    %1734 = vmatpush2.msra.mxu0 0.0
    %1735 = vmatprep.subr.mxu0 0.0
    %1736 = vmatpush2.msra.mxu0 0.0
    %1737 = vmatprep.subr.mxu0 0.0
    %1738 = vmatpush2.msra.mxu0 0.0
    %1739 = vmatprep.subr.mxu0 0.0
    %1740 = vmatpush2.msra.mxu0 0.0
    %1741 = vmatprep.subr.mxu0 0.0
    %1742 = vmatpush2.msra.mxu0 0.0
    %1743 = vmatprep.subr.mxu0 0.0
    %1744 = vmatpush2.msra.mxu0 0.0
    %1745 = vmatprep.subr.mxu0 0.0
    %1746 = vmatpush2.msra.mxu0 0.0
    %1747 = vmatprep.subr.mxu0 0.0
    %1748 = vmatpush2.msra.mxu0 0.0
    %1749 = vmatprep.subr.mxu0 0.0
    %1750 = vmatpush2.msra.mxu0 0.0
    %1751 = vmatprep.mubr.f32.mxu0 0.0
    %1752 = vmatmul.mubr.f32.gmra.mxu0 %v1685
    %v1753 = vpop.f32.mrf.mxu0
    %v1754 = vadd.f32 %v1683, %v1753
    %v1755 = vpop.f32.mrf.mxu0
    %1756 = vdwg.mxu0
    %v1757 = vmax.f32 %v1754, 0.0
    %v1759 = vsel %vm130, %v1757, 0
    %1761 = vmatprep.subr.mxu0 0.0
    %1762 = vmatpush1.msra.mxu0 0.0
    %1763 = vmatprep.subr.mxu0 0.0
    %1764 = vmatpush1.msra.mxu0 0.0
    %1765 = vmatprep.subr.mxu0 0.0
    %1766 = vmatpush1.msra.mxu0 0.0
    %1767 = vmatprep.subr.mxu0 0.0
    %1768 = vmatpush1.msra.mxu0 0.0
    %1769 = vmatprep.subr.mxu0 0.0
    %1770 = vmatpush1.msra.mxu0 0.0
    %1771 = vmatprep.subr.mxu0 0.0
    %1772 = vmatpush1.msra.mxu0 0.0
    %1773 = vmatprep.subr.mxu0 0.0
    %1774 = vmatpush1.msra.mxu0 0.0
    %1775 = vmatprep.subr.mxu0 0.0
    %1776 = vmatpush1.msra.mxu0 0.0
    %1777 = vmatprep.subr.mxu0 0.0
    %1778 = vmatpush1.msra.mxu0 0.0
    %1779 = vmatprep.subr.mxu0 0.0
    %1780 = vmatpush1.msra.mxu0 0.0
    %1781 = vmatprep.subr.mxu0 0.0
    %1782 = vmatpush1.msra.mxu0 0.0
    %1783 = vmatprep.subr.mxu0 0.0
    %1784 = vmatpush1.msra.mxu0 0.0
    %1785 = vmatprep.subr.mxu0 0.0
    %1786 = vmatpush1.msra.mxu0 %v122
    %1787 = vmatprep.subr.mxu0 0.0
    %1788 = vmatpush1.msra.mxu0 %v121
    %1789 = vmatprep.subr.mxu0 0.0
    %1790 = vmatpush1.msra.mxu0 %v120
    %1791 = vmatprep.subr.mxu0 0.0
    %1792 = vmatpush1.msra.mxu0 %v119
    %1793 = vmatprep.subr.mxu0 0.0
    %1794 = vmatpush2.msra.mxu0 0.0
    %1795 = vmatprep.subr.mxu0 0.0
    %1796 = vmatpush2.msra.mxu0 0.0
    %1797 = vmatprep.subr.mxu0 0.0
    %1798 = vmatpush2.msra.mxu0 0.0
    %1799 = vmatprep.subr.mxu0 0.0
    %1800 = vmatpush2.msra.mxu0 0.0
    %1801 = vmatprep.subr.mxu0 0.0
    %1802 = vmatpush2.msra.mxu0 0.0
    %1803 = vmatprep.subr.mxu0 0.0
    %1804 = vmatpush2.msra.mxu0 0.0
    %1805 = vmatprep.subr.mxu0 0.0
    %1806 = vmatpush2.msra.mxu0 0.0
    %1807 = vmatprep.subr.mxu0 0.0
    %1808 = vmatpush2.msra.mxu0 0.0
    %1809 = vmatprep.subr.mxu0 0.0
    %1810 = vmatpush2.msra.mxu0 0.0
    %1811 = vmatprep.subr.mxu0 0.0
    %1812 = vmatpush2.msra.mxu0 0.0
    %1813 = vmatprep.subr.mxu0 0.0
    %1814 = vmatpush2.msra.mxu0 0.0
    %1815 = vmatprep.subr.mxu0 0.0
    %1816 = vmatpush2.msra.mxu0 0.0
    %1817 = vmatprep.subr.mxu0 0.0
    %1818 = vmatpush2.msra.mxu0 0.0
    %1819 = vmatprep.subr.mxu0 0.0
    %1820 = vmatpush2.msra.mxu0 0.0
    %1821 = vmatprep.subr.mxu0 0.0
    %1822 = vmatpush2.msra.mxu0 0.0
    %1823 = vmatprep.subr.mxu0 0.0
    %1824 = vmatpush2.msra.mxu0 0.0
    %1825 = vmatprep.mubr.f32.mxu0 0.0
    %1826 = vmatmul.mubr.f32.gmra.mxu0 %v1759
    %v1827 = vpop.f32.mrf.mxu0
    %v1828 = vadd.f32 %v128, %v1827
    %v1829 = vpop.f32.mrf.mxu0
    %1830 = vdwg.mxu0
    %v1831 = vmax.f32 %v1828, 0.0
    %v1833 = vsel %vm130, %v1831, 0
    %1835 = vmatprep.subr.mxu0 0.0
    %1836 = vmatpush1.msra.mxu0 0.0
    %1837 = vmatprep.subr.mxu0 0.0
    %1838 = vmatpush1.msra.mxu0 0.0
    %1839 = vmatprep.subr.mxu0 0.0
    %1840 = vmatpush1.msra.mxu0 0.0
    %1841 = vmatprep.subr.mxu0 0.0
    %1842 = vmatpush1.msra.mxu0 0.0
    %1843 = vmatprep.subr.mxu0 0.0
    %1844 = vmatpush1.msra.mxu0 0.0
    %1845 = vmatprep.subr.mxu0 0.0
    %1846 = vmatpush1.msra.mxu0 0.0
    %1847 = vmatprep.subr.mxu0 0.0
    %1848 = vmatpush1.msra.mxu0 0.0
    %1849 = vmatprep.subr.mxu0 0.0
    %1850 = vmatpush1.msra.mxu0 0.0
    %1851 = vmatprep.subr.mxu0 0.0
    %1852 = vmatpush1.msra.mxu0 0.0
    %1853 = vmatprep.subr.mxu0 0.0
    %1854 = vmatpush1.msra.mxu0 0.0
    %1855 = vmatprep.subr.mxu0 0.0
    %1856 = vmatpush1.msra.mxu0 0.0
    %1857 = vmatprep.subr.mxu0 0.0
    %1858 = vmatpush1.msra.mxu0 0.0
    %1859 = vmatprep.subr.mxu0 0.0
    %1860 = vmatpush1.msra.mxu0 %v208
    %1861 = vmatprep.subr.mxu0 0.0
    %1862 = vmatpush1.msra.mxu0 %v207
    %1863 = vmatprep.subr.mxu0 0.0
    %1864 = vmatpush1.msra.mxu0 %v206
    %1865 = vmatprep.subr.mxu0 0.0
    %1866 = vmatpush1.msra.mxu0 %v205
    %1867 = vmatprep.subr.mxu0 0.0
    %1868 = vmatpush2.msra.mxu0 0.0
    %1869 = vmatprep.subr.mxu0 0.0
    %1870 = vmatpush2.msra.mxu0 0.0
    %1871 = vmatprep.subr.mxu0 0.0
    %1872 = vmatpush2.msra.mxu0 0.0
    %1873 = vmatprep.subr.mxu0 0.0
    %1874 = vmatpush2.msra.mxu0 0.0
    %1875 = vmatprep.subr.mxu0 0.0
    %1876 = vmatpush2.msra.mxu0 0.0
    %1877 = vmatprep.subr.mxu0 0.0
    %1878 = vmatpush2.msra.mxu0 0.0
    %1879 = vmatprep.subr.mxu0 0.0
    %1880 = vmatpush2.msra.mxu0 0.0
    %1881 = vmatprep.subr.mxu0 0.0
    %1882 = vmatpush2.msra.mxu0 0.0
    %1883 = vmatprep.subr.mxu0 0.0
    %1884 = vmatpush2.msra.mxu0 0.0
    %1885 = vmatprep.subr.mxu0 0.0
    %1886 = vmatpush2.msra.mxu0 0.0
    %1887 = vmatprep.subr.mxu0 0.0
    %1888 = vmatpush2.msra.mxu0 0.0
    %1889 = vmatprep.subr.mxu0 0.0
    %1890 = vmatpush2.msra.mxu0 0.0
    %1891 = vmatprep.subr.mxu0 0.0
    %1892 = vmatpush2.msra.mxu0 0.0
    %1893 = vmatprep.subr.mxu0 0.0
    %1894 = vmatpush2.msra.mxu0 0.0
    %1895 = vmatprep.subr.mxu0 0.0
    %1896 = vmatpush2.msra.mxu0 0.0
    %1897 = vmatprep.subr.mxu0 0.0
    %1898 = vmatpush2.msra.mxu0 0.0
    %1899 = vmatprep.mubr.f32.mxu0 0.0
    %1900 = vmatmul.mubr.f32.gmra.mxu0 %v1833
    %v1901 = vpop.f32.mrf.mxu0
    %v1902 = vadd.f32 %v214, %v1901
    %v1903 = vpop.f32.mrf.mxu0
    %1904 = vdwg.mxu0
    %s1905 = scalar_lea.vmem %s3, 14
    %v1906 = vld [vmem:[%s1905] sm:$0x3]
    %v1907 = vsub.f32 %v1902, %v1906
    %s1908 = sld [smem:[#allocation3 + $0x7]]
    %v1909 = vmul.f32 %v1907, %v1907
    %v1910 = vstv %s1908
    %v1911 = vmul.f32 %v1910, %v1909
    %v1912 = vadd.f32 %v1681, %v1911
    %vm1913 = vcmask 25600
    %1914 = vst.msk [vmem:[#allocation4] sm:$0x3] %vm1913, %v1912
    // Predicated region
    $region34: #{tpu_custom_call.1} parent=1 // pred_check
      _
    $region35: #{tpu_custom_call.1} parent=1 // pred_check_branch
      %1916 = sbr.rel (0) target = $region37
    $region36: #{tpu_custom_call.1} parent=1 // pred_region
      %s1918 = ssub.s32 32, 32
      %1919 = vsyncadd [#allocation5], %s1918
      %s1921 = sshll.u32 [#allocation4], 4
      %s1922 = int_to_ptr.vmem [resolvable:$true] %s1921
      %1924 = dma.vmem_to_hbm [thread:$0]  %s1922, 32, %s9, [#allocation5]
    $region37: #{tpu_custom_call.1} parent=1 // pred_fallthru
      _
    // Predicated region
    $region38: #{tpu_custom_call.1} parent=1 // pred_check
      _
    $region39: #{tpu_custom_call.1} parent=1 // pred_check_branch
      %1926 = sbr.rel (0) target = $region41
    $region40: #{tpu_custom_call.1} parent=1 // pred_region
      %1927 = dma.done [#allocation5], 32
    $region41: #{tpu_custom_call.1} parent=1 // pred_fallthru
      _
    %1928 = vsyncpa [#allocation5], 1

</llo_original>
